<compile_context>
chip_gen: v7x
topology: tpu7x:2x2x1
jax: 0.10.0
libtpu: 0.0.40
codegen_flags: <defaults>
</compile_context>

<pallas_src>
import functools

import jax
import jax.numpy as jnp
from jax.experimental import pallas as pl
from jax.experimental.pallas import tpu as pltpu


# ------------------------------ fused model kernel -----------------------------
def _fused_lstm_fc_kernel(*refs, num_layers, T, Bp, H):
    # refs: x_ref, then per layer (wih_ref, whh_ref, b_ref), fc_w_ref, fc_b_ref,
    #       out_ref, seq_scratch
    x_ref = refs[0]
    layer_refs = refs[1:1 + 3 * num_layers]
    fc_w_ref = refs[1 + 3 * num_layers]
    fc_b_ref = refs[2 + 3 * num_layers]
    out_ref = refs[3 + 3 * num_layers]
    seq_scratch = refs[4 + 3 * num_layers]          # VMEM (T*Bp, H)

    h = None
    for l in range(num_layers):
        wih_ref = layer_refs[3 * l + 0]             # (in, 4H) fused gate slab, lane-dense
        whh_ref = layer_refs[3 * l + 1]             # (H, 4H)
        b_ref = layer_refs[3 * l + 2]               # (1, 4H)  fused b_ih + b_hh

        # Layer input: original sequence for layer 0, previous layer's hidden
        # sequence (staged in VMEM scratch) otherwise.
        seq = x_ref[...] if l == 0 else seq_scratch[...]     # (T*Bp, in)

        # Hoisted input projection: ONE big matmul over all timesteps, outside the
        # serial h->h dependency chain.
        proj = jnp.dot(seq, wih_ref[...],
                       preferred_element_type=jnp.float32) + b_ref[...]   # (T*Bp, 4H)

        w_hh = whh_ref[...]                          # hoisted: single load per layer
        h = jnp.zeros((Bp, H), jnp.float32)
        c = jnp.zeros((Bp, H), jnp.float32)
        last_layer = (l == num_layers - 1)

        # Static unroll; fine at small T.  # TODO(synk): lax.fori_loop for large T.
        for t in range(T):
            # ONE fused-gate matmul per step: (Bp,H) x (H,4H=128) -> full MXU lanes.
            g = proj[t * Bp:(t + 1) * Bp, :] + jnp.dot(
                h, w_hh, preferred_element_type=jnp.float32)              # (Bp, 4H)
            i_g = jax.nn.sigmoid(g[:, 0 * H:1 * H])
            f_g = jax.nn.sigmoid(g[:, 1 * H:2 * H])
            g_g = jnp.tanh(g[:, 2 * H:3 * H])
            o_g = jax.nn.sigmoid(g[:, 3 * H:4 * H])
            c = f_g * c + i_g * g_g
            h = o_g * jnp.tanh(c)
            if not last_layer:
                # Lane-dense, sublane-aligned store; bounds live ranges to one step.
                seq_scratch[t * Bp:(t + 1) * Bp, :] = h

    # Fused FC head on the last timestep (dropout identity in eval mode).
    out = jnp.dot(h, fc_w_ref[...], preferred_element_type=jnp.float32) + fc_b_ref[...]
    out_ref[...] = out.astype(out_ref.dtype)         # unmasked (Bp, O_pad) store


# ---------------------------------- wrapper ------------------------------------
def lstm_model_forward(x, params):
    """x: (B, T, input_size) batch-first (PyTorch convention). Returns (B, output_size)."""
    B, T, I = x.shape
    lstm_layers = params["lstm"]
    num_layers = len(lstm_layers)
    H = lstm_layers[0]["w_hh_s"].shape[0]
    O = params["out_features"]
    O_pad = params["fc_w_pad"].shape[1]

    # Pad batch to a full sublane group (multiple of 8) -> all per-step slices and the
    # output store are aligned/unmasked. Extra rows are zeros and discarded.
    Bp = ((B + 7) // 8) * 8
    x_p = jnp.zeros((Bp, T, I), jnp.float32).at[:B].set(x.astype(jnp.float32))

    # Time-major, flattened over (T, Bp): the input projection is one matmul per layer.
    x_tm = jnp.transpose(x_p, (1, 0, 2)).reshape(T * Bp, I)

    args = [x_tm]
    in_specs = [pl.BlockSpec((T * Bp, I), lambda i: (0, 0))]
    for layer in lstm_layers:
        in_sz = layer["w_ih_s"].shape[0]
        args += [layer["w_ih_s"], layer["w_hh_s"], layer["b_s"]]
        in_specs += [
            pl.BlockSpec((in_sz, 4 * H), lambda i: (0, 0)),
            pl.BlockSpec((H, 4 * H), lambda i: (0, 0)),
            pl.BlockSpec((1, 4 * H), lambda i: (0, 0)),
        ]
    args += [params["fc_w_pad"], params["fc_b_pad"]]
    in_specs += [
        pl.BlockSpec((H, O_pad), lambda i: (0, 0)),
        pl.BlockSpec((1, O_pad), lambda i: (0, 0)),
    ]

    kernel = functools.partial(
        _fused_lstm_fc_kernel, num_layers=num_layers, T=T, Bp=Bp, H=H)

    out_pad = pl.pallas_call(
        kernel,
        out_shape=jax.ShapeDtypeStruct((Bp, O_pad), jnp.float32),
        grid_spec=pltpu.PrefetchScalarGridSpec(
            num_scalar_prefetch=0,
            grid=(1,),
            in_specs=in_specs,
            out_specs=pl.BlockSpec((Bp, O_pad), lambda i: (0, 0)),
            scratch_shapes=[pltpu.VMEM((T * Bp, H), jnp.float32)],
        ),
        compiler_params=pltpu.CompilerParams(
            dimension_semantics=("arbitrary",),   # recurrence is strictly sequential
            vmem_limit_bytes=32 * 1024 * 1024,
        ),
    )(*args)
    return out_pad[:B, :O]


# ---------------------------- parameter construction ---------------------------
def init_params(key, input_size, hidden_size, num_layers, output_size):
    """Deterministic init mimicking PyTorch's U(-1/sqrt(H), 1/sqrt(H)); PyTorch layout."""
    k = 1.0 / jnp.sqrt(hidden_size)
    layers = []
    for l in range(num_layers):
        in_sz = input_size if l == 0 else hidden_size
        key, k1, k2, k3, k4 = jax.random.split(key, 5)
        w_ih = jax.random.uniform(k1, (4 * hidden_size, in_sz), jnp.float32, -k, k)
        w_hh = jax.random.uniform(k2, (4 * hidden_size, hidden_size), jnp.float32, -k, k)
        b_ih = jax.random.uniform(k3, (4 * hidden_size,), jnp.float32, -k, k)
        b_hh = jax.random.uniform(k4, (4 * hidden_size,), jnp.float32, -k, k)
        layers.append(dict(w_ih=w_ih, w_hh=w_hh, b_ih=b_ih, b_hh=b_hh))
    key, k5, k6 = jax.random.split(key, 3)
    fc_w = jax.random.uniform(k5, (output_size, hidden_size), jnp.float32, -k, k)
    fc_b = jax.random.uniform(k6, (output_size,), jnp.float32, -k, k)
    return dict(lstm=layers, fc_w=fc_w, fc_b=fc_b)


def prepare_params(raw, hidden_size, output_size):
    """PyTorch-layout weights -> kernel layout: fused lane-dense gate slabs
    w_ih:(in,4H), w_hh:(H,4H), bias:(1,4H) (gate order i,f,g,o preserved by the
    transpose), and the FC head padded to 128 output lanes."""
    H = hidden_size
    layers = []
    for layer in raw["lstm"]:
        w_ih_s = layer["w_ih"].T                                   # (in, 4H)
        w_hh_s = layer["w_hh"].T                                   # (H, 4H)
        b_s = (layer["b_ih"] + layer["b_hh"]).reshape(1, 4 * H)    # (1, 4H)
        layers.append(dict(w_ih_s=w_ih_s, w_hh_s=w_hh_s, b_s=b_s))
    O = output_size
    O_pad = ((O + 127) // 128) * 128
    fc_w_pad = jnp.zeros((H, O_pad), jnp.float32).at[:, :O].set(raw["fc_w"].T)
    fc_b_pad = jnp.zeros((1, O_pad), jnp.float32).at[0, :O].set(raw["fc_b"])
    return dict(lstm=layers, fc_w_pad=fc_w_pad, fc_b_pad=fc_b_pad, out_features=O)


# ------------------------------ pure-JAX reference -----------------------------
def _reference_forward(x, raw):
    B = x.shape[0]
    h_seq = jnp.transpose(x, (1, 0, 2))
    for layer in raw["lstm"]:
        w_ih_t, w_hh_t = layer["w_ih"].T, layer["w_hh"].T
        bias = layer["b_ih"] + layer["b_hh"]
        H = w_hh_t.shape[0]
        h = jnp.zeros((B, H), jnp.float32)
        c = jnp.zeros((B, H), jnp.float32)
        outs = []
        for t in range(h_seq.shape[0]):
            gates = h_seq[t] @ w_ih_t + h @ w_hh_t + bias
            i_g = jax.nn.sigmoid(gates[:, 0 * H:1 * H])
            f_g = jax.nn.sigmoid(gates[:, 1 * H:2 * H])
            g_g = jnp.tanh(gates[:, 2 * H:3 * H])
            o_g = jax.nn.sigmoid(gates[:, 3 * H:4 * H])
            c = f_g * c + i_g * g_g
            h = o_g * jnp.tanh(c)
            outs.append(h)
        h_seq = jnp.stack(outs, axis=0)
    return h_seq[-1] @ raw["fc_w"].T + raw["fc_b"]


if __name__ == "__main__":
    B, T = 4, 8
    input_size, hidden_size, num_layers, output_size = 16, 32, 2, 8

    key = jax.random.PRNGKey(0)
    kx, kp = jax.random.split(key)
    x = jax.random.normal(kx, (B, T, input_size), jnp.float32)

    raw = init_params(kp, input_size, hidden_size, num_layers, output_size)
    params = prepare_params(raw, hidden_size, output_size)

    fwd = jax.jit(lambda xx: lstm_model_forward(xx, params))
    out = jax.block_until_ready(fwd(x))

    ref = _reference_forward(x, raw)
    assert out.shape == (B, output_size)
    assert jnp.allclose(out, ref, atol=1e-5, rtol=1e-5), "mismatch vs reference"

    print("KERNEL_OK")
</pallas_src>

<mosaic_0001>
module attributes {stable_mosaic.version = 11 : i64} {
  func.func @_fused_lstm_fc_kernel(%arg0: i32, %arg1: memref<64x16xf32, #tpu.memory_space<vmem>>, %arg2: memref<16x128xf32, #tpu.memory_space<vmem>>, %arg3: memref<32x128xf32, #tpu.memory_space<vmem>>, %arg4: memref<1x128xf32, #tpu.memory_space<vmem>>, %arg5: memref<32x128xf32, #tpu.memory_space<vmem>>, %arg6: memref<32x128xf32, #tpu.memory_space<vmem>>, %arg7: memref<1x128xf32, #tpu.memory_space<vmem>>, %arg8: memref<32x128xf32, #tpu.memory_space<vmem>>, %arg9: memref<1x128xf32, #tpu.memory_space<vmem>>, %arg10: memref<8x128xf32, #tpu.memory_space<vmem>>, %arg11: memref<64x32xf32, #tpu.memory_space<vmem>>) attributes {dimension_semantics = [#tpu.dimension_semantics<arbitrary>], iteration_bounds = array<i64: 1>, scalar_prefetch = 0 : i64, scratch_operands = 1 : i64, tpu.core_type = #tpu.core_type<tc>, window_params = [{pipeline_mode = #tpu.pipeline_mode<synchronous>, transform_indices = @transform_0, window_bounds = array<i64: 64, 16>}, {pipeline_mode = #tpu.pipeline_mode<synchronous>, transform_indices = @transform_1, window_bounds = array<i64: 16, 128>}, {pipeline_mode = #tpu.pipeline_mode<synchronous>, transform_indices = @transform_2, window_bounds = array<i64: 32, 128>}, {pipeline_mode = #tpu.pipeline_mode<synchronous>, transform_indices = @transform_3, window_bounds = array<i64: 1, 128>}, {pipeline_mode = #tpu.pipeline_mode<synchronous>, transform_indices = @transform_4, window_bounds = array<i64: 32, 128>}, {pipeline_mode = #tpu.pipeline_mode<synchronous>, transform_indices = @transform_5, window_bounds = array<i64: 32, 128>}, {pipeline_mode = #tpu.pipeline_mode<synchronous>, transform_indices = @transform_6, window_bounds = array<i64: 1, 128>}, {pipeline_mode = #tpu.pipeline_mode<synchronous>, transform_indices = @transform_7, window_bounds = array<i64: 32, 128>}, {pipeline_mode = #tpu.pipeline_mode<synchronous>, transform_indices = @transform_8, window_bounds = array<i64: 1, 128>}, {pipeline_mode = #tpu.pipeline_mode<synchronous>, transform_indices = @transform_9, window_bounds = array<i64: 8, 128>}]} {
    %c0 = arith.constant 0 : index
    %c0_0 = arith.constant 0 : index
    %0 = vector.load %arg1[%c0, %c0_0] : memref<64x16xf32, #tpu.memory_space<vmem>>, vector<64x16xf32>
    %c0_1 = arith.constant 0 : index
    %c0_2 = arith.constant 0 : index
    %1 = vector.load %arg2[%c0_1, %c0_2] : memref<16x128xf32, #tpu.memory_space<vmem>>, vector<16x128xf32>
    %cst = arith.constant dense<0.000000e+00> : vector<64x128xf32>
    %2 = tpu.matmul %0, %1, %cst {dimension_numbers = #tpu.dot_dimension_numbers<[1], [0], [0], [1], [0, 0, 1, 1], [], []>} : vector<64x16xf32>, vector<16x128xf32>, vector<64x128xf32> -> vector<64x128xf32>
    %c0_3 = arith.constant 0 : index
    %c0_4 = arith.constant 0 : index
    %3 = vector.load %arg4[%c0_3, %c0_4] : memref<1x128xf32, #tpu.memory_space<vmem>>, vector<1x128xf32>
    %4 = vector.broadcast %3 : vector<1x128xf32> to vector<64x128xf32>
    %5 = arith.addf %2, %4 : vector<64x128xf32>
    %c0_5 = arith.constant 0 : index
    %c0_6 = arith.constant 0 : index
    %6 = vector.load %arg3[%c0_5, %c0_6] : memref<32x128xf32, #tpu.memory_space<vmem>>, vector<32x128xf32>
    %cst_7 = arith.constant 0.000000e+00 : f32
    %7 = vector.broadcast %cst_7 : f32 to vector<8x32xf32>
    %cst_8 = arith.constant 0.000000e+00 : f32
    %8 = vector.broadcast %cst_8 : f32 to vector<8x32xf32>
    %9 = vector.extract_strided_slice %5 {offsets = [0, 0], sizes = [8, 128], strides = [1, 1]} : vector<64x128xf32> to vector<8x128xf32>
    %cst_9 = arith.constant dense<0.000000e+00> : vector<8x128xf32>
    %10 = tpu.matmul %7, %6, %cst_9 {dimension_numbers = #tpu.dot_dimension_numbers<[1], [0], [0], [1], [0, 0, 1, 1], [], []>} : vector<8x32xf32>, vector<32x128xf32>, vector<8x128xf32> -> vector<8x128xf32>
    %11 = arith.addf %9, %10 : vector<8x128xf32>
    %12 = vector.extract_strided_slice %11 {offsets = [0, 0], sizes = [8, 32], strides = [1, 1]} : vector<8x128xf32> to vector<8x32xf32>
    %13 = arith.negf %12 : vector<8x32xf32>
    %14 = math.exp %13 : vector<8x32xf32>
    %cst_10 = arith.constant 1.000000e+00 : f32
    %15 = vector.broadcast %cst_10 : f32 to vector<8x32xf32>
    %16 = arith.addf %15, %14 : vector<8x32xf32>
    %17 = arith.divf %15, %16 : vector<8x32xf32>
    %18 = vector.extract_strided_slice %11 {offsets = [0, 32], sizes = [8, 32], strides = [1, 1]} : vector<8x128xf32> to vector<8x32xf32>
    %19 = arith.negf %18 : vector<8x32xf32>
    %20 = math.exp %19 : vector<8x32xf32>
    %cst_11 = arith.constant 1.000000e+00 : f32
    %21 = vector.broadcast %cst_11 : f32 to vector<8x32xf32>
    %22 = arith.addf %21, %20 : vector<8x32xf32>
    %23 = arith.divf %21, %22 : vector<8x32xf32>
    %24 = vector.extract_strided_slice %11 {offsets = [0, 64], sizes = [8, 32], strides = [1, 1]} : vector<8x128xf32> to vector<8x32xf32>
    %25 = math.tanh %24 : vector<8x32xf32>
    %26 = vector.extract_strided_slice %11 {offsets = [0, 96], sizes = [8, 32], strides = [1, 1]} : vector<8x128xf32> to vector<8x32xf32>
    %27 = arith.negf %26 : vector<8x32xf32>
    %28 = math.exp %27 : vector<8x32xf32>
    %cst_12 = arith.constant 1.000000e+00 : f32
    %29 = vector.broadcast %cst_12 : f32 to vector<8x32xf32>
    %30 = arith.addf %29, %28 : vector<8x32xf32>
    %31 = arith.divf %29, %30 : vector<8x32xf32>
    %32 = arith.mulf %23, %8 : vector<8x32xf32>
    %33 = arith.mulf %17, %25 : vector<8x32xf32>
    %34 = arith.addf %32, %33 : vector<8x32xf32>
    %35 = math.tanh %34 : vector<8x32xf32>
    %36 = arith.mulf %31, %35 : vector<8x32xf32>
    %c0_13 = arith.constant 0 : index
    %c0_14 = arith.constant 0 : index
    %37 = vector.load %arg11[%c0_13, %c0_14] : memref<64x32xf32, #tpu.memory_space<vmem>>, vector<8x32xf32>
    tpu.vector_store %arg11[%c0_13, %c0_14], %36 {strides = array<i32>} : memref<64x32xf32, #tpu.memory_space<vmem>>, vector<8x32xf32>,
    %38 = vector.extract_strided_slice %5 {offsets = [8, 0], sizes = [8, 128], strides = [1, 1]} : vector<64x128xf32> to vector<8x128xf32>
    %cst_15 = arith.constant dense<0.000000e+00> : vector<8x128xf32>
    %39 = tpu.matmul %36, %6, %cst_15 {dimension_numbers = #tpu.dot_dimension_numbers<[1], [0], [0], [1], [0, 0, 1, 1], [], []>} : vector<8x32xf32>, vector<32x128xf32>, vector<8x128xf32> -> vector<8x128xf32>
    %40 = arith.addf %38, %39 : vector<8x128xf32>
    %41 = vector.extract_strided_slice %40 {offsets = [0, 0], sizes = [8, 32], strides = [1, 1]} : vector<8x128xf32> to vector<8x32xf32>
    %42 = arith.negf %41 : vector<8x32xf32>
    %43 = math.exp %42 : vector<8x32xf32>
    %cst_16 = arith.constant 1.000000e+00 : f32
    %44 = vector.broadcast %cst_16 : f32 to vector<8x32xf32>
    %45 = arith.addf %44, %43 : vector<8x32xf32>
    %46 = arith.divf %44, %45 : vector<8x32xf32>
    %47 = vector.extract_strided_slice %40 {offsets = [0, 32], sizes = [8, 32], strides = [1, 1]} : vector<8x128xf32> to vector<8x32xf32>
    %48 = arith.negf %47 : vector<8x32xf32>
    %49 = math.exp %48 : vector<8x32xf32>
    %cst_17 = arith.constant 1.000000e+00 : f32
    %50 = vector.broadcast %cst_17 : f32 to vector<8x32xf32>
    %51 = arith.addf %50, %49 : vector<8x32xf32>
    %52 = arith.divf %50, %51 : vector<8x32xf32>
    %53 = vector.extract_strided_slice %40 {offsets = [0, 64], sizes = [8, 32], strides = [1, 1]} : vector<8x128xf32> to vector<8x32xf32>
    %54 = math.tanh %53 : vector<8x32xf32>
    %55 = vector.extract_strided_slice %40 {offsets = [0, 96], sizes = [8, 32], strides = [1, 1]} : vector<8x128xf32> to vector<8x32xf32>
    %56 = arith.negf %55 : vector<8x32xf32>
    %57 = math.exp %56 : vector<8x32xf32>
    %cst_18 = arith.constant 1.000000e+00 : f32
    %58 = vector.broadcast %cst_18 : f32 to vector<8x32xf32>
    %59 = arith.addf %58, %57 : vector<8x32xf32>
    %60 = arith.divf %58, %59 : vector<8x32xf32>
    %61 = arith.mulf %52, %34 : vector<8x32xf32>
    %62 = arith.mulf %46, %54 : vector<8x32xf32>
    %63 = arith.addf %61, %62 : vector<8x32xf32>
    %64 = math.tanh %63 : vector<8x32xf32>
    %65 = arith.mulf %60, %64 : vector<8x32xf32>
    %c8 = arith.constant 8 : index
    %c0_19 = arith.constant 0 : index
    %66 = vector.load %arg11[%c8, %c0_19] : memref<64x32xf32, #tpu.memory_space<vmem>>, vector<8x32xf32>
    tpu.vector_store %arg11[%c8, %c0_19], %65 {strides = array<i32>} : memref<64x32xf32, #tpu.memory_space<vmem>>, vector<8x32xf32>,
    %67 = vector.extract_strided_slice %5 {offsets = [16, 0], sizes = [8, 128], strides = [1, 1]} : vector<64x128xf32> to vector<8x128xf32>
    %cst_20 = arith.constant dense<0.000000e+00> : vector<8x128xf32>
    %68 = tpu.matmul %65, %6, %cst_20 {dimension_numbers = #tpu.dot_dimension_numbers<[1], [0], [0], [1], [0, 0, 1, 1], [], []>} : vector<8x32xf32>, vector<32x128xf32>, vector<8x128xf32> -> vector<8x128xf32>
    %69 = arith.addf %67, %68 : vector<8x128xf32>
    %70 = vector.extract_strided_slice %69 {offsets = [0, 0], sizes = [8, 32], strides = [1, 1]} : vector<8x128xf32> to vector<8x32xf32>
    %71 = arith.negf %70 : vector<8x32xf32>
    %72 = math.exp %71 : vector<8x32xf32>
    %cst_21 = arith.constant 1.000000e+00 : f32
    %73 = vector.broadcast %cst_21 : f32 to vector<8x32xf32>
    %74 = arith.addf %73, %72 : vector<8x32xf32>
    %75 = arith.divf %73, %74 : vector<8x32xf32>
    %76 = vector.extract_strided_slice %69 {offsets = [0, 32], sizes = [8, 32], strides = [1, 1]} : vector<8x128xf32> to vector<8x32xf32>
    %77 = arith.negf %76 : vector<8x32xf32>
    %78 = math.exp %77 : vector<8x32xf32>
    %cst_22 = arith.constant 1.000000e+00 : f32
    %79 = vector.broadcast %cst_22 : f32 to vector<8x32xf32>
    %80 = arith.addf %79, %78 : vector<8x32xf32>
    %81 = arith.divf %79, %80 : vector<8x32xf32>
    %82 = vector.extract_strided_slice %69 {offsets = [0, 64], sizes = [8, 32], strides = [1, 1]} : vector<8x128xf32> to vector<8x32xf32>
    %83 = math.tanh %82 : vector<8x32xf32>
    %84 = vector.extract_strided_slice %69 {offsets = [0, 96], sizes = [8, 32], strides = [1, 1]} : vector<8x128xf32> to vector<8x32xf32>
    %85 = arith.negf %84 : vector<8x32xf32>
    %86 = math.exp %85 : vector<8x32xf32>
    %cst_23 = arith.constant 1.000000e+00 : f32
    %87 = vector.broadcast %cst_23 : f32 to vector<8x32xf32>
    %88 = arith.addf %87, %86 : vector<8x32xf32>
    %89 = arith.divf %87, %88 : vector<8x32xf32>
    %90 = arith.mulf %81, %63 : vector<8x32xf32>
    %91 = arith.mulf %75, %83 : vector<8x32xf32>
    %92 = arith.addf %90, %91 : vector<8x32xf32>
    %93 = math.tanh %92 : vector<8x32xf32>
    %94 = arith.mulf %89, %93 : vector<8x32xf32>
    %c16 = arith.constant 16 : index
    %c0_24 = arith.constant 0 : index
    %95 = vector.load %arg11[%c16, %c0_24] : memref<64x32xf32, #tpu.memory_space<vmem>>, vector<8x32xf32>
    tpu.vector_store %arg11[%c16, %c0_24], %94 {strides = array<i32>} : memref<64x32xf32, #tpu.memory_space<vmem>>, vector<8x32xf32>,
    %96 = vector.extract_strided_slice %5 {offsets = [24, 0], sizes = [8, 128], strides = [1, 1]} : vector<64x128xf32> to vector<8x128xf32>
    %cst_25 = arith.constant dense<0.000000e+00> : vector<8x128xf32>
    %97 = tpu.matmul %94, %6, %cst_25 {dimension_numbers = #tpu.dot_dimension_numbers<[1], [0], [0], [1], [0, 0, 1, 1], [], []>} : vector<8x32xf32>, vector<32x128xf32>, vector<8x128xf32> -> vector<8x128xf32>
    %98 = arith.addf %96, %97 : vector<8x128xf32>
    %99 = vector.extract_strided_slice %98 {offsets = [0, 0], sizes = [8, 32], strides = [1, 1]} : vector<8x128xf32> to vector<8x32xf32>
    %100 = arith.negf %99 : vector<8x32xf32>
    %101 = math.exp %100 : vector<8x32xf32>
    %cst_26 = arith.constant 1.000000e+00 : f32
    %102 = vector.broadcast %cst_26 : f32 to vector<8x32xf32>
    %103 = arith.addf %102, %101 : vector<8x32xf32>
    %104 = arith.divf %102, %103 : vector<8x32xf32>
    %105 = vector.extract_strided_slice %98 {offsets = [0, 32], sizes = [8, 32], strides = [1, 1]} : vector<8x128xf32> to vector<8x32xf32>
    %106 = arith.negf %105 : vector<8x32xf32>
    %107 = math.exp %106 : vector<8x32xf32>
    %cst_27 = arith.constant 1.000000e+00 : f32
    %108 = vector.broadcast %cst_27 : f32 to vector<8x32xf32>
    %109 = arith.addf %108, %107 : vector<8x32xf32>
    %110 = arith.divf %108, %109 : vector<8x32xf32>
    %111 = vector.extract_strided_slice %98 {offsets = [0, 64], sizes = [8, 32], strides = [1, 1]} : vector<8x128xf32> to vector<8x32xf32>
    %112 = math.tanh %111 : vector<8x32xf32>
    %113 = vector.extract_strided_slice %98 {offsets = [0, 96], sizes = [8, 32], strides = [1, 1]} : vector<8x128xf32> to vector<8x32xf32>
    %114 = arith.negf %113 : vector<8x32xf32>
    %115 = math.exp %114 : vector<8x32xf32>
    %cst_28 = arith.constant 1.000000e+00 : f32
    %116 = vector.broadcast %cst_28 : f32 to vector<8x32xf32>
    %117 = arith.addf %116, %115 : vector<8x32xf32>
    %118 = arith.divf %116, %117 : vector<8x32xf32>
    %119 = arith.mulf %110, %92 : vector<8x32xf32>
    %120 = arith.mulf %104, %112 : vector<8x32xf32>
    %121 = arith.addf %119, %120 : vector<8x32xf32>
    %122 = math.tanh %121 : vector<8x32xf32>
    %123 = arith.mulf %118, %122 : vector<8x32xf32>
    %c24 = arith.constant 24 : index
    %c0_29 = arith.constant 0 : index
    %124 = vector.load %arg11[%c24, %c0_29] : memref<64x32xf32, #tpu.memory_space<vmem>>, vector<8x32xf32>
    tpu.vector_store %arg11[%c24, %c0_29], %123 {strides = array<i32>} : memref<64x32xf32, #tpu.memory_space<vmem>>, vector<8x32xf32>,
    %125 = vector.extract_strided_slice %5 {offsets = [32, 0], sizes = [8, 128], strides = [1, 1]} : vector<64x128xf32> to vector<8x128xf32>
    %cst_30 = arith.constant dense<0.000000e+00> : vector<8x128xf32>
    %126 = tpu.matmul %123, %6, %cst_30 {dimension_numbers = #tpu.dot_dimension_numbers<[1], [0], [0], [1], [0, 0, 1, 1], [], []>} : vector<8x32xf32>, vector<32x128xf32>, vector<8x128xf32> -> vector<8x128xf32>
    %127 = arith.addf %125, %126 : vector<8x128xf32>
    %128 = vector.extract_strided_slice %127 {offsets = [0, 0], sizes = [8, 32], strides = [1, 1]} : vector<8x128xf32> to vector<8x32xf32>
    %129 = arith.negf %128 : vector<8x32xf32>
    %130 = math.exp %129 : vector<8x32xf32>
    %cst_31 = arith.constant 1.000000e+00 : f32
    %131 = vector.broadcast %cst_31 : f32 to vector<8x32xf32>
    %132 = arith.addf %131, %130 : vector<8x32xf32>
    %133 = arith.divf %131, %132 : vector<8x32xf32>
    %134 = vector.extract_strided_slice %127 {offsets = [0, 32], sizes = [8, 32], strides = [1, 1]} : vector<8x128xf32> to vector<8x32xf32>
    %135 = arith.negf %134 : vector<8x32xf32>
    %136 = math.exp %135 : vector<8x32xf32>
    %cst_32 = arith.constant 1.000000e+00 : f32
    %137 = vector.broadcast %cst_32 : f32 to vector<8x32xf32>
    %138 = arith.addf %137, %136 : vector<8x32xf32>
    %139 = arith.divf %137, %138 : vector<8x32xf32>
    %140 = vector.extract_strided_slice %127 {offsets = [0, 64], sizes = [8, 32], strides = [1, 1]} : vector<8x128xf32> to vector<8x32xf32>
    %141 = math.tanh %140 : vector<8x32xf32>
    %142 = vector.extract_strided_slice %127 {offsets = [0, 96], sizes = [8, 32], strides = [1, 1]} : vector<8x128xf32> to vector<8x32xf32>
    %143 = arith.negf %142 : vector<8x32xf32>
    %144 = math.exp %143 : vector<8x32xf32>
    %cst_33 = arith.constant 1.000000e+00 : f32
    %145 = vector.broadcast %cst_33 : f32 to vector<8x32xf32>
    %146 = arith.addf %145, %144 : vector<8x32xf32>
    %147 = arith.divf %145, %146 : vector<8x32xf32>
    %148 = arith.mulf %139, %121 : vector<8x32xf32>
    %149 = arith.mulf %133, %141 : vector<8x32xf32>
    %150 = arith.addf %148, %149 : vector<8x32xf32>
    %151 = math.tanh %150 : vector<8x32xf32>
    %152 = arith.mulf %147, %151 : vector<8x32xf32>
    %c32 = arith.constant 32 : index
    %c0_34 = arith.constant 0 : index
    %153 = vector.load %arg11[%c32, %c0_34] : memref<64x32xf32, #tpu.memory_space<vmem>>, vector<8x32xf32>
    tpu.vector_store %arg11[%c32, %c0_34], %152 {strides = array<i32>} : memref<64x32xf32, #tpu.memory_space<vmem>>, vector<8x32xf32>,
    %154 = vector.extract_strided_slice %5 {offsets = [40, 0], sizes = [8, 128], strides = [1, 1]} : vector<64x128xf32> to vector<8x128xf32>
    %cst_35 = arith.constant dense<0.000000e+00> : vector<8x128xf32>
    %155 = tpu.matmul %152, %6, %cst_35 {dimension_numbers = #tpu.dot_dimension_numbers<[1], [0], [0], [1], [0, 0, 1, 1], [], []>} : vector<8x32xf32>, vector<32x128xf32>, vector<8x128xf32> -> vector<8x128xf32>
    %156 = arith.addf %154, %155 : vector<8x128xf32>
    %157 = vector.extract_strided_slice %156 {offsets = [0, 0], sizes = [8, 32], strides = [1, 1]} : vector<8x128xf32> to vector<8x32xf32>
    %158 = arith.negf %157 : vector<8x32xf32>
    %159 = math.exp %158 : vector<8x32xf32>
    %cst_36 = arith.constant 1.000000e+00 : f32
    %160 = vector.broadcast %cst_36 : f32 to vector<8x32xf32>
    %161 = arith.addf %160, %159 : vector<8x32xf32>
    %162 = arith.divf %160, %161 : vector<8x32xf32>
    %163 = vector.extract_strided_slice %156 {offsets = [0, 32], sizes = [8, 32], strides = [1, 1]} : vector<8x128xf32> to vector<8x32xf32>
    %164 = arith.negf %163 : vector<8x32xf32>
    %165 = math.exp %164 : vector<8x32xf32>
    %cst_37 = arith.constant 1.000000e+00 : f32
    %166 = vector.broadcast %cst_37 : f32 to vector<8x32xf32>
    %167 = arith.addf %166, %165 : vector<8x32xf32>
    %168 = arith.divf %166, %167 : vector<8x32xf32>
    %169 = vector.extract_strided_slice %156 {offsets = [0, 64], sizes = [8, 32], strides = [1, 1]} : vector<8x128xf32> to vector<8x32xf32>
    %170 = math.tanh %169 : vector<8x32xf32>
    %171 = vector.extract_strided_slice %156 {offsets = [0, 96], sizes = [8, 32], strides = [1, 1]} : vector<8x128xf32> to vector<8x32xf32>
    %172 = arith.negf %171 : vector<8x32xf32>
    %173 = math.exp %172 : vector<8x32xf32>
    %cst_38 = arith.constant 1.000000e+00 : f32
    %174 = vector.broadcast %cst_38 : f32 to vector<8x32xf32>
    %175 = arith.addf %174, %173 : vector<8x32xf32>
    %176 = arith.divf %174, %175 : vector<8x32xf32>
    %177 = arith.mulf %168, %150 : vector<8x32xf32>
    %178 = arith.mulf %162, %170 : vector<8x32xf32>
    %179 = arith.addf %177, %178 : vector<8x32xf32>
    %180 = math.tanh %179 : vector<8x32xf32>
    %181 = arith.mulf %176, %180 : vector<8x32xf32>
    %c40 = arith.constant 40 : index
    %c0_39 = arith.constant 0 : index
    %182 = vector.load %arg11[%c40, %c0_39] : memref<64x32xf32, #tpu.memory_space<vmem>>, vector<8x32xf32>
    tpu.vector_store %arg11[%c40, %c0_39], %181 {strides = array<i32>} : memref<64x32xf32, #tpu.memory_space<vmem>>, vector<8x32xf32>,
    %183 = vector.extract_strided_slice %5 {offsets = [48, 0], sizes = [8, 128], strides = [1, 1]} : vector<64x128xf32> to vector<8x128xf32>
    %cst_40 = arith.constant dense<0.000000e+00> : vector<8x128xf32>
    %184 = tpu.matmul %181, %6, %cst_40 {dimension_numbers = #tpu.dot_dimension_numbers<[1], [0], [0], [1], [0, 0, 1, 1], [], []>} : vector<8x32xf32>, vector<32x128xf32>, vector<8x128xf32> -> vector<8x128xf32>
    %185 = arith.addf %183, %184 : vector<8x128xf32>
    %186 = vector.extract_strided_slice %185 {offsets = [0, 0], sizes = [8, 32], strides = [1, 1]} : vector<8x128xf32> to vector<8x32xf32>
    %187 = arith.negf %186 : vector<8x32xf32>
    %188 = math.exp %187 : vector<8x32xf32>
    %cst_41 = arith.constant 1.000000e+00 : f32
    %189 = vector.broadcast %cst_41 : f32 to vector<8x32xf32>
    %190 = arith.addf %189, %188 : vector<8x32xf32>
    %191 = arith.divf %189, %190 : vector<8x32xf32>
    %192 = vector.extract_strided_slice %185 {offsets = [0, 32], sizes = [8, 32], strides = [1, 1]} : vector<8x128xf32> to vector<8x32xf32>
    %193 = arith.negf %192 : vector<8x32xf32>
    %194 = math.exp %193 : vector<8x32xf32>
    %cst_42 = arith.constant 1.000000e+00 : f32
    %195 = vector.broadcast %cst_42 : f32 to vector<8x32xf32>
    %196 = arith.addf %195, %194 : vector<8x32xf32>
    %197 = arith.divf %195, %196 : vector<8x32xf32>
    %198 = vector.extract_strided_slice %185 {offsets = [0, 64], sizes = [8, 32], strides = [1, 1]} : vector<8x128xf32> to vector<8x32xf32>
    %199 = math.tanh %198 : vector<8x32xf32>
    %200 = vector.extract_strided_slice %185 {offsets = [0, 96], sizes = [8, 32], strides = [1, 1]} : vector<8x128xf32> to vector<8x32xf32>
    %201 = arith.negf %200 : vector<8x32xf32>
    %202 = math.exp %201 : vector<8x32xf32>
    %cst_43 = arith.constant 1.000000e+00 : f32
    %203 = vector.broadcast %cst_43 : f32 to vector<8x32xf32>
    %204 = arith.addf %203, %202 : vector<8x32xf32>
    %205 = arith.divf %203, %204 : vector<8x32xf32>
    %206 = arith.mulf %197, %179 : vector<8x32xf32>
    %207 = arith.mulf %191, %199 : vector<8x32xf32>
    %208 = arith.addf %206, %207 : vector<8x32xf32>
    %209 = math.tanh %208 : vector<8x32xf32>
    %210 = arith.mulf %205, %209 : vector<8x32xf32>
    %c48 = arith.constant 48 : index
    %c0_44 = arith.constant 0 : index
    %211 = vector.load %arg11[%c48, %c0_44] : memref<64x32xf32, #tpu.memory_space<vmem>>, vector<8x32xf32>
    tpu.vector_store %arg11[%c48, %c0_44], %210 {strides = array<i32>} : memref<64x32xf32, #tpu.memory_space<vmem>>, vector<8x32xf32>,
    %212 = vector.extract_strided_slice %5 {offsets = [56, 0], sizes = [8, 128], strides = [1, 1]} : vector<64x128xf32> to vector<8x128xf32>
    %cst_45 = arith.constant dense<0.000000e+00> : vector<8x128xf32>
    %213 = tpu.matmul %210, %6, %cst_45 {dimension_numbers = #tpu.dot_dimension_numbers<[1], [0], [0], [1], [0, 0, 1, 1], [], []>} : vector<8x32xf32>, vector<32x128xf32>, vector<8x128xf32> -> vector<8x128xf32>
    %214 = arith.addf %212, %213 : vector<8x128xf32>
    %215 = vector.extract_strided_slice %214 {offsets = [0, 0], sizes = [8, 32], strides = [1, 1]} : vector<8x128xf32> to vector<8x32xf32>
    %216 = arith.negf %215 : vector<8x32xf32>
    %217 = math.exp %216 : vector<8x32xf32>
    %cst_46 = arith.constant 1.000000e+00 : f32
    %218 = vector.broadcast %cst_46 : f32 to vector<8x32xf32>
    %219 = arith.addf %218, %217 : vector<8x32xf32>
    %220 = arith.divf %218, %219 : vector<8x32xf32>
    %221 = vector.extract_strided_slice %214 {offsets = [0, 32], sizes = [8, 32], strides = [1, 1]} : vector<8x128xf32> to vector<8x32xf32>
    %222 = arith.negf %221 : vector<8x32xf32>
    %223 = math.exp %222 : vector<8x32xf32>
    %cst_47 = arith.constant 1.000000e+00 : f32
    %224 = vector.broadcast %cst_47 : f32 to vector<8x32xf32>
    %225 = arith.addf %224, %223 : vector<8x32xf32>
    %226 = arith.divf %224, %225 : vector<8x32xf32>
    %227 = vector.extract_strided_slice %214 {offsets = [0, 64], sizes = [8, 32], strides = [1, 1]} : vector<8x128xf32> to vector<8x32xf32>
    %228 = math.tanh %227 : vector<8x32xf32>
    %229 = vector.extract_strided_slice %214 {offsets = [0, 96], sizes = [8, 32], strides = [1, 1]} : vector<8x128xf32> to vector<8x32xf32>
    %230 = arith.negf %229 : vector<8x32xf32>
    %231 = math.exp %230 : vector<8x32xf32>
    %cst_48 = arith.constant 1.000000e+00 : f32
    %232 = vector.broadcast %cst_48 : f32 to vector<8x32xf32>
    %233 = arith.addf %232, %231 : vector<8x32xf32>
    %234 = arith.divf %232, %233 : vector<8x32xf32>
    %235 = arith.mulf %226, %208 : vector<8x32xf32>
    %236 = arith.mulf %220, %228 : vector<8x32xf32>
    %237 = arith.addf %235, %236 : vector<8x32xf32>
    %238 = math.tanh %237 : vector<8x32xf32>
    %239 = arith.mulf %234, %238 : vector<8x32xf32>
    %c56 = arith.constant 56 : index
    %c0_49 = arith.constant 0 : index
    %240 = vector.load %arg11[%c56, %c0_49] : memref<64x32xf32, #tpu.memory_space<vmem>>, vector<8x32xf32>
    tpu.vector_store %arg11[%c56, %c0_49], %239 {strides = array<i32>} : memref<64x32xf32, #tpu.memory_space<vmem>>, vector<8x32xf32>,
    %c0_50 = arith.constant 0 : index
    %c0_51 = arith.constant 0 : index
    %241 = vector.load %arg11[%c0_50, %c0_51] : memref<64x32xf32, #tpu.memory_space<vmem>>, vector<64x32xf32>
    %c0_52 = arith.constant 0 : index
    %c0_53 = arith.constant 0 : index
    %242 = vector.load %arg5[%c0_52, %c0_53] : memref<32x128xf32, #tpu.memory_space<vmem>>, vector<32x128xf32>
    %cst_54 = arith.constant dense<0.000000e+00> : vector<64x128xf32>
    %243 = tpu.matmul %241, %242, %cst_54 {dimension_numbers = #tpu.dot_dimension_numbers<[1], [0], [0], [1], [0, 0, 1, 1], [], []>} : vector<64x32xf32>, vector<32x128xf32>, vector<64x128xf32> -> vector<64x128xf32>
    %c0_55 = arith.constant 0 : index
    %c0_56 = arith.constant 0 : index
    %244 = vector.load %arg7[%c0_55, %c0_56] : memref<1x128xf32, #tpu.memory_space<vmem>>, vector<1x128xf32>
    %245 = vector.broadcast %244 : vector<1x128xf32> to vector<64x128xf32>
    %246 = arith.addf %243, %245 : vector<64x128xf32>
    %c0_57 = arith.constant 0 : index
    %c0_58 = arith.constant 0 : index
    %247 = vector.load %arg6[%c0_57, %c0_58] : memref<32x128xf32, #tpu.memory_space<vmem>>, vector<32x128xf32>
    %cst_59 = arith.constant 0.000000e+00 : f32
    %248 = vector.broadcast %cst_59 : f32 to vector<8x32xf32>
    %cst_60 = arith.constant 0.000000e+00 : f32
    %249 = vector.broadcast %cst_60 : f32 to vector<8x32xf32>
    %250 = vector.extract_strided_slice %246 {offsets = [0, 0], sizes = [8, 128], strides = [1, 1]} : vector<64x128xf32> to vector<8x128xf32>
    %cst_61 = arith.constant dense<0.000000e+00> : vector<8x128xf32>
    %251 = tpu.matmul %248, %247, %cst_61 {dimension_numbers = #tpu.dot_dimension_numbers<[1], [0], [0], [1], [0, 0, 1, 1], [], []>} : vector<8x32xf32>, vector<32x128xf32>, vector<8x128xf32> -> vector<8x128xf32>
    %252 = arith.addf %250, %251 : vector<8x128xf32>
    %253 = vector.extract_strided_slice %252 {offsets = [0, 0], sizes = [8, 32], strides = [1, 1]} : vector<8x128xf32> to vector<8x32xf32>
    %254 = arith.negf %253 : vector<8x32xf32>
    %255 = math.exp %254 : vector<8x32xf32>
    %cst_62 = arith.constant 1.000000e+00 : f32
    %256 = vector.broadcast %cst_62 : f32 to vector<8x32xf32>
    %257 = arith.addf %256, %255 : vector<8x32xf32>
    %258 = arith.divf %256, %257 : vector<8x32xf32>
    %259 = vector.extract_strided_slice %252 {offsets = [0, 32], sizes = [8, 32], strides = [1, 1]} : vector<8x128xf32> to vector<8x32xf32>
    %260 = arith.negf %259 : vector<8x32xf32>
    %261 = math.exp %260 : vector<8x32xf32>
    %cst_63 = arith.constant 1.000000e+00 : f32
    %262 = vector.broadcast %cst_63 : f32 to vector<8x32xf32>
    %263 = arith.addf %262, %261 : vector<8x32xf32>
    %264 = arith.divf %262, %263 : vector<8x32xf32>
    %265 = vector.extract_strided_slice %252 {offsets = [0, 64], sizes = [8, 32], strides = [1, 1]} : vector<8x128xf32> to vector<8x32xf32>
    %266 = math.tanh %265 : vector<8x32xf32>
    %267 = vector.extract_strided_slice %252 {offsets = [0, 96], sizes = [8, 32], strides = [1, 1]} : vector<8x128xf32> to vector<8x32xf32>
    %268 = arith.negf %267 : vector<8x32xf32>
    %269 = math.exp %268 : vector<8x32xf32>
    %cst_64 = arith.constant 1.000000e+00 : f32
    %270 = vector.broadcast %cst_64 : f32 to vector<8x32xf32>
    %271 = arith.addf %270, %269 : vector<8x32xf32>
    %272 = arith.divf %270, %271 : vector<8x32xf32>
    %273 = arith.mulf %264, %249 : vector<8x32xf32>
    %274 = arith.mulf %258, %266 : vector<8x32xf32>
    %275 = arith.addf %273, %274 : vector<8x32xf32>
    %276 = math.tanh %275 : vector<8x32xf32>
    %277 = arith.mulf %272, %276 : vector<8x32xf32>
    %278 = vector.extract_strided_slice %246 {offsets = [8, 0], sizes = [8, 128], strides = [1, 1]} : vector<64x128xf32> to vector<8x128xf32>
    %cst_65 = arith.constant dense<0.000000e+00> : vector<8x128xf32>
    %279 = tpu.matmul %277, %247, %cst_65 {dimension_numbers = #tpu.dot_dimension_numbers<[1], [0], [0], [1], [0, 0, 1, 1], [], []>} : vector<8x32xf32>, vector<32x128xf32>, vector<8x128xf32> -> vector<8x128xf32>
    %280 = arith.addf %278, %279 : vector<8x128xf32>
    %281 = vector.extract_strided_slice %280 {offsets = [0, 0], sizes = [8, 32], strides = [1, 1]} : vector<8x128xf32> to vector<8x32xf32>
    %282 = arith.negf %281 : vector<8x32xf32>
    %283 = math.exp %282 : vector<8x32xf32>
    %cst_66 = arith.constant 1.000000e+00 : f32
    %284 = vector.broadcast %cst_66 : f32 to vector<8x32xf32>
    %285 = arith.addf %284, %283 : vector<8x32xf32>
    %286 = arith.divf %284, %285 : vector<8x32xf32>
    %287 = vector.extract_strided_slice %280 {offsets = [0, 32], sizes = [8, 32], strides = [1, 1]} : vector<8x128xf32> to vector<8x32xf32>
    %288 = arith.negf %287 : vector<8x32xf32>
    %289 = math.exp %288 : vector<8x32xf32>
    %cst_67 = arith.constant 1.000000e+00 : f32
    %290 = vector.broadcast %cst_67 : f32 to vector<8x32xf32>
    %291 = arith.addf %290, %289 : vector<8x32xf32>
    %292 = arith.divf %290, %291 : vector<8x32xf32>
    %293 = vector.extract_strided_slice %280 {offsets = [0, 64], sizes = [8, 32], strides = [1, 1]} : vector<8x128xf32> to vector<8x32xf32>
    %294 = math.tanh %293 : vector<8x32xf32>
    %295 = vector.extract_strided_slice %280 {offsets = [0, 96], sizes = [8, 32], strides = [1, 1]} : vector<8x128xf32> to vector<8x32xf32>
    %296 = arith.negf %295 : vector<8x32xf32>
    %297 = math.exp %296 : vector<8x32xf32>
    %cst_68 = arith.constant 1.000000e+00 : f32
    %298 = vector.broadcast %cst_68 : f32 to vector<8x32xf32>
    %299 = arith.addf %298, %297 : vector<8x32xf32>
    %300 = arith.divf %298, %299 : vector<8x32xf32>
    %301 = arith.mulf %292, %275 : vector<8x32xf32>
    %302 = arith.mulf %286, %294 : vector<8x32xf32>
    %303 = arith.addf %301, %302 : vector<8x32xf32>
    %304 = math.tanh %303 : vector<8x32xf32>
    %305 = arith.mulf %300, %304 : vector<8x32xf32>
    %306 = vector.extract_strided_slice %246 {offsets = [16, 0], sizes = [8, 128], strides = [1, 1]} : vector<64x128xf32> to vector<8x128xf32>
    %cst_69 = arith.constant dense<0.000000e+00> : vector<8x128xf32>
    %307 = tpu.matmul %305, %247, %cst_69 {dimension_numbers = #tpu.dot_dimension_numbers<[1], [0], [0], [1], [0, 0, 1, 1], [], []>} : vector<8x32xf32>, vector<32x128xf32>, vector<8x128xf32> -> vector<8x128xf32>
    %308 = arith.addf %306, %307 : vector<8x128xf32>
    %309 = vector.extract_strided_slice %308 {offsets = [0, 0], sizes = [8, 32], strides = [1, 1]} : vector<8x128xf32> to vector<8x32xf32>
    %310 = arith.negf %309 : vector<8x32xf32>
    %311 = math.exp %310 : vector<8x32xf32>
    %cst_70 = arith.constant 1.000000e+00 : f32
    %312 = vector.broadcast %cst_70 : f32 to vector<8x32xf32>
    %313 = arith.addf %312, %311 : vector<8x32xf32>
    %314 = arith.divf %312, %313 : vector<8x32xf32>
    %315 = vector.extract_strided_slice %308 {offsets = [0, 32], sizes = [8, 32], strides = [1, 1]} : vector<8x128xf32> to vector<8x32xf32>
    %316 = arith.negf %315 : vector<8x32xf32>
    %317 = math.exp %316 : vector<8x32xf32>
    %cst_71 = arith.constant 1.000000e+00 : f32
    %318 = vector.broadcast %cst_71 : f32 to vector<8x32xf32>
    %319 = arith.addf %318, %317 : vector<8x32xf32>
    %320 = arith.divf %318, %319 : vector<8x32xf32>
    %321 = vector.extract_strided_slice %308 {offsets = [0, 64], sizes = [8, 32], strides = [1, 1]} : vector<8x128xf32> to vector<8x32xf32>
    %322 = math.tanh %321 : vector<8x32xf32>
    %323 = vector.extract_strided_slice %308 {offsets = [0, 96], sizes = [8, 32], strides = [1, 1]} : vector<8x128xf32> to vector<8x32xf32>
    %324 = arith.negf %323 : vector<8x32xf32>
    %325 = math.exp %324 : vector<8x32xf32>
    %cst_72 = arith.constant 1.000000e+00 : f32
    %326 = vector.broadcast %cst_72 : f32 to vector<8x32xf32>
    %327 = arith.addf %326, %325 : vector<8x32xf32>
    %328 = arith.divf %326, %327 : vector<8x32xf32>
    %329 = arith.mulf %320, %303 : vector<8x32xf32>
    %330 = arith.mulf %314, %322 : vector<8x32xf32>
    %331 = arith.addf %329, %330 : vector<8x32xf32>
    %332 = math.tanh %331 : vector<8x32xf32>
    %333 = arith.mulf %328, %332 : vector<8x32xf32>
    %334 = vector.extract_strided_slice %246 {offsets = [24, 0], sizes = [8, 128], strides = [1, 1]} : vector<64x128xf32> to vector<8x128xf32>
    %cst_73 = arith.constant dense<0.000000e+00> : vector<8x128xf32>
    %335 = tpu.matmul %333, %247, %cst_73 {dimension_numbers = #tpu.dot_dimension_numbers<[1], [0], [0], [1], [0, 0, 1, 1], [], []>} : vector<8x32xf32>, vector<32x128xf32>, vector<8x128xf32> -> vector<8x128xf32>
    %336 = arith.addf %334, %335 : vector<8x128xf32>
    %337 = vector.extract_strided_slice %336 {offsets = [0, 0], sizes = [8, 32], strides = [1, 1]} : vector<8x128xf32> to vector<8x32xf32>
    %338 = arith.negf %337 : vector<8x32xf32>
    %339 = math.exp %338 : vector<8x32xf32>
    %cst_74 = arith.constant 1.000000e+00 : f32
    %340 = vector.broadcast %cst_74 : f32 to vector<8x32xf32>
    %341 = arith.addf %340, %339 : vector<8x32xf32>
    %342 = arith.divf %340, %341 : vector<8x32xf32>
    %343 = vector.extract_strided_slice %336 {offsets = [0, 32], sizes = [8, 32], strides = [1, 1]} : vector<8x128xf32> to vector<8x32xf32>
    %344 = arith.negf %343 : vector<8x32xf32>
    %345 = math.exp %344 : vector<8x32xf32>
    %cst_75 = arith.constant 1.000000e+00 : f32
    %346 = vector.broadcast %cst_75 : f32 to vector<8x32xf32>
    %347 = arith.addf %346, %345 : vector<8x32xf32>
    %348 = arith.divf %346, %347 : vector<8x32xf32>
    %349 = vector.extract_strided_slice %336 {offsets = [0, 64], sizes = [8, 32], strides = [1, 1]} : vector<8x128xf32> to vector<8x32xf32>
    %350 = math.tanh %349 : vector<8x32xf32>
    %351 = vector.extract_strided_slice %336 {offsets = [0, 96], sizes = [8, 32], strides = [1, 1]} : vector<8x128xf32> to vector<8x32xf32>
    %352 = arith.negf %351 : vector<8x32xf32>
    %353 = math.exp %352 : vector<8x32xf32>
    %cst_76 = arith.constant 1.000000e+00 : f32
    %354 = vector.broadcast %cst_76 : f32 to vector<8x32xf32>
    %355 = arith.addf %354, %353 : vector<8x32xf32>
    %356 = arith.divf %354, %355 : vector<8x32xf32>
    %357 = arith.mulf %348, %331 : vector<8x32xf32>
    %358 = arith.mulf %342, %350 : vector<8x32xf32>
    %359 = arith.addf %357, %358 : vector<8x32xf32>
    %360 = math.tanh %359 : vector<8x32xf32>
    %361 = arith.mulf %356, %360 : vector<8x32xf32>
    %362 = vector.extract_strided_slice %246 {offsets = [32, 0], sizes = [8, 128], strides = [1, 1]} : vector<64x128xf32> to vector<8x128xf32>
    %cst_77 = arith.constant dense<0.000000e+00> : vector<8x128xf32>
    %363 = tpu.matmul %361, %247, %cst_77 {dimension_numbers = #tpu.dot_dimension_numbers<[1], [0], [0], [1], [0, 0, 1, 1], [], []>} : vector<8x32xf32>, vector<32x128xf32>, vector<8x128xf32> -> vector<8x128xf32>
    %364 = arith.addf %362, %363 : vector<8x128xf32>
    %365 = vector.extract_strided_slice %364 {offsets = [0, 0], sizes = [8, 32], strides = [1, 1]} : vector<8x128xf32> to vector<8x32xf32>
    %366 = arith.negf %365 : vector<8x32xf32>
    %367 = math.exp %366 : vector<8x32xf32>
    %cst_78 = arith.constant 1.000000e+00 : f32
    %368 = vector.broadcast %cst_78 : f32 to vector<8x32xf32>
    %369 = arith.addf %368, %367 : vector<8x32xf32>
    %370 = arith.divf %368, %369 : vector<8x32xf32>
    %371 = vector.extract_strided_slice %364 {offsets = [0, 32], sizes = [8, 32], strides = [1, 1]} : vector<8x128xf32> to vector<8x32xf32>
    %372 = arith.negf %371 : vector<8x32xf32>
    %373 = math.exp %372 : vector<8x32xf32>
    %cst_79 = arith.constant 1.000000e+00 : f32
    %374 = vector.broadcast %cst_79 : f32 to vector<8x32xf32>
    %375 = arith.addf %374, %373 : vector<8x32xf32>
    %376 = arith.divf %374, %375 : vector<8x32xf32>
    %377 = vector.extract_strided_slice %364 {offsets = [0, 64], sizes = [8, 32], strides = [1, 1]} : vector<8x128xf32> to vector<8x32xf32>
    %378 = math.tanh %377 : vector<8x32xf32>
    %379 = vector.extract_strided_slice %364 {offsets = [0, 96], sizes = [8, 32], strides = [1, 1]} : vector<8x128xf32> to vector<8x32xf32>
    %380 = arith.negf %379 : vector<8x32xf32>
    %381 = math.exp %380 : vector<8x32xf32>
    %cst_80 = arith.constant 1.000000e+00 : f32
    %382 = vector.broadcast %cst_80 : f32 to vector<8x32xf32>
    %383 = arith.addf %382, %381 : vector<8x32xf32>
    %384 = arith.divf %382, %383 : vector<8x32xf32>
    %385 = arith.mulf %376, %359 : vector<8x32xf32>
    %386 = arith.mulf %370, %378 : vector<8x32xf32>
    %387 = arith.addf %385, %386 : vector<8x32xf32>
    %388 = math.tanh %387 : vector<8x32xf32>
    %389 = arith.mulf %384, %388 : vector<8x32xf32>
    %390 = vector.extract_strided_slice %246 {offsets = [40, 0], sizes = [8, 128], strides = [1, 1]} : vector<64x128xf32> to vector<8x128xf32>
    %cst_81 = arith.constant dense<0.000000e+00> : vector<8x128xf32>
    %391 = tpu.matmul %389, %247, %cst_81 {dimension_numbers = #tpu.dot_dimension_numbers<[1], [0], [0], [1], [0, 0, 1, 1], [], []>} : vector<8x32xf32>, vector<32x128xf32>, vector<8x128xf32> -> vector<8x128xf32>
    %392 = arith.addf %390, %391 : vector<8x128xf32>
    %393 = vector.extract_strided_slice %392 {offsets = [0, 0], sizes = [8, 32], strides = [1, 1]} : vector<8x128xf32> to vector<8x32xf32>
    %394 = arith.negf %393 : vector<8x32xf32>
    %395 = math.exp %394 : vector<8x32xf32>
    %cst_82 = arith.constant 1.000000e+00 : f32
    %396 = vector.broadcast %cst_82 : f32 to vector<8x32xf32>
    %397 = arith.addf %396, %395 : vector<8x32xf32>
    %398 = arith.divf %396, %397 : vector<8x32xf32>
    %399 = vector.extract_strided_slice %392 {offsets = [0, 32], sizes = [8, 32], strides = [1, 1]} : vector<8x128xf32> to vector<8x32xf32>
    %400 = arith.negf %399 : vector<8x32xf32>
    %401 = math.exp %400 : vector<8x32xf32>
    %cst_83 = arith.constant 1.000000e+00 : f32
    %402 = vector.broadcast %cst_83 : f32 to vector<8x32xf32>
    %403 = arith.addf %402, %401 : vector<8x32xf32>
    %404 = arith.divf %402, %403 : vector<8x32xf32>
    %405 = vector.extract_strided_slice %392 {offsets = [0, 64], sizes = [8, 32], strides = [1, 1]} : vector<8x128xf32> to vector<8x32xf32>
    %406 = math.tanh %405 : vector<8x32xf32>
    %407 = vector.extract_strided_slice %392 {offsets = [0, 96], sizes = [8, 32], strides = [1, 1]} : vector<8x128xf32> to vector<8x32xf32>
    %408 = arith.negf %407 : vector<8x32xf32>
    %409 = math.exp %408 : vector<8x32xf32>
    %cst_84 = arith.constant 1.000000e+00 : f32
    %410 = vector.broadcast %cst_84 : f32 to vector<8x32xf32>
    %411 = arith.addf %410, %409 : vector<8x32xf32>
    %412 = arith.divf %410, %411 : vector<8x32xf32>
    %413 = arith.mulf %404, %387 : vector<8x32xf32>
    %414 = arith.mulf %398, %406 : vector<8x32xf32>
    %415 = arith.addf %413, %414 : vector<8x32xf32>
    %416 = math.tanh %415 : vector<8x32xf32>
    %417 = arith.mulf %412, %416 : vector<8x32xf32>
    %418 = vector.extract_strided_slice %246 {offsets = [48, 0], sizes = [8, 128], strides = [1, 1]} : vector<64x128xf32> to vector<8x128xf32>
    %cst_85 = arith.constant dense<0.000000e+00> : vector<8x128xf32>
    %419 = tpu.matmul %417, %247, %cst_85 {dimension_numbers = #tpu.dot_dimension_numbers<[1], [0], [0], [1], [0, 0, 1, 1], [], []>} : vector<8x32xf32>, vector<32x128xf32>, vector<8x128xf32> -> vector<8x128xf32>
    %420 = arith.addf %418, %419 : vector<8x128xf32>
    %421 = vector.extract_strided_slice %420 {offsets = [0, 0], sizes = [8, 32], strides = [1, 1]} : vector<8x128xf32> to vector<8x32xf32>
    %422 = arith.negf %421 : vector<8x32xf32>
    %423 = math.exp %422 : vector<8x32xf32>
    %cst_86 = arith.constant 1.000000e+00 : f32
    %424 = vector.broadcast %cst_86 : f32 to vector<8x32xf32>
    %425 = arith.addf %424, %423 : vector<8x32xf32>
    %426 = arith.divf %424, %425 : vector<8x32xf32>
    %427 = vector.extract_strided_slice %420 {offsets = [0, 32], sizes = [8, 32], strides = [1, 1]} : vector<8x128xf32> to vector<8x32xf32>
    %428 = arith.negf %427 : vector<8x32xf32>
    %429 = math.exp %428 : vector<8x32xf32>
    %cst_87 = arith.constant 1.000000e+00 : f32
    %430 = vector.broadcast %cst_87 : f32 to vector<8x32xf32>
    %431 = arith.addf %430, %429 : vector<8x32xf32>
    %432 = arith.divf %430, %431 : vector<8x32xf32>
    %433 = vector.extract_strided_slice %420 {offsets = [0, 64], sizes = [8, 32], strides = [1, 1]} : vector<8x128xf32> to vector<8x32xf32>
    %434 = math.tanh %433 : vector<8x32xf32>
    %435 = vector.extract_strided_slice %420 {offsets = [0, 96], sizes = [8, 32], strides = [1, 1]} : vector<8x128xf32> to vector<8x32xf32>
    %436 = arith.negf %435 : vector<8x32xf32>
    %437 = math.exp %436 : vector<8x32xf32>
    %cst_88 = arith.constant 1.000000e+00 : f32
    %438 = vector.broadcast %cst_88 : f32 to vector<8x32xf32>
    %439 = arith.addf %438, %437 : vector<8x32xf32>
    %440 = arith.divf %438, %439 : vector<8x32xf32>
    %441 = arith.mulf %432, %415 : vector<8x32xf32>
    %442 = arith.mulf %426, %434 : vector<8x32xf32>
    %443 = arith.addf %441, %442 : vector<8x32xf32>
    %444 = math.tanh %443 : vector<8x32xf32>
    %445 = arith.mulf %440, %444 : vector<8x32xf32>
    %446 = vector.extract_strided_slice %246 {offsets = [56, 0], sizes = [8, 128], strides = [1, 1]} : vector<64x128xf32> to vector<8x128xf32>
    %cst_89 = arith.constant dense<0.000000e+00> : vector<8x128xf32>
    %447 = tpu.matmul %445, %247, %cst_89 {dimension_numbers = #tpu.dot_dimension_numbers<[1], [0], [0], [1], [0, 0, 1, 1], [], []>} : vector<8x32xf32>, vector<32x128xf32>, vector<8x128xf32> -> vector<8x128xf32>
    %448 = arith.addf %446, %447 : vector<8x128xf32>
    %449 = vector.extract_strided_slice %448 {offsets = [0, 0], sizes = [8, 32], strides = [1, 1]} : vector<8x128xf32> to vector<8x32xf32>
    %450 = arith.negf %449 : vector<8x32xf32>
    %451 = math.exp %450 : vector<8x32xf32>
    %cst_90 = arith.constant 1.000000e+00 : f32
    %452 = vector.broadcast %cst_90 : f32 to vector<8x32xf32>
    %453 = arith.addf %452, %451 : vector<8x32xf32>
    %454 = arith.divf %452, %453 : vector<8x32xf32>
    %455 = vector.extract_strided_slice %448 {offsets = [0, 32], sizes = [8, 32], strides = [1, 1]} : vector<8x128xf32> to vector<8x32xf32>
    %456 = arith.negf %455 : vector<8x32xf32>
    %457 = math.exp %456 : vector<8x32xf32>
    %cst_91 = arith.constant 1.000000e+00 : f32
    %458 = vector.broadcast %cst_91 : f32 to vector<8x32xf32>
    %459 = arith.addf %458, %457 : vector<8x32xf32>
    %460 = arith.divf %458, %459 : vector<8x32xf32>
    %461 = vector.extract_strided_slice %448 {offsets = [0, 64], sizes = [8, 32], strides = [1, 1]} : vector<8x128xf32> to vector<8x32xf32>
    %462 = math.tanh %461 : vector<8x32xf32>
    %463 = vector.extract_strided_slice %448 {offsets = [0, 96], sizes = [8, 32], strides = [1, 1]} : vector<8x128xf32> to vector<8x32xf32>
    %464 = arith.negf %463 : vector<8x32xf32>
    %465 = math.exp %464 : vector<8x32xf32>
    %cst_92 = arith.constant 1.000000e+00 : f32
    %466 = vector.broadcast %cst_92 : f32 to vector<8x32xf32>
    %467 = arith.addf %466, %465 : vector<8x32xf32>
    %468 = arith.divf %466, %467 : vector<8x32xf32>
    %469 = arith.mulf %460, %443 : vector<8x32xf32>
    %470 = arith.mulf %454, %462 : vector<8x32xf32>
    %471 = arith.addf %469, %470 : vector<8x32xf32>
    %472 = math.tanh %471 : vector<8x32xf32>
    %473 = arith.mulf %468, %472 : vector<8x32xf32>
    %c0_93 = arith.constant 0 : index
    %c0_94 = arith.constant 0 : index
    %474 = vector.load %arg8[%c0_93, %c0_94] : memref<32x128xf32, #tpu.memory_space<vmem>>, vector<32x128xf32>
    %cst_95 = arith.constant dense<0.000000e+00> : vector<8x128xf32>
    %475 = tpu.matmul %473, %474, %cst_95 {dimension_numbers = #tpu.dot_dimension_numbers<[1], [0], [0], [1], [0, 0, 1, 1], [], []>} : vector<8x32xf32>, vector<32x128xf32>, vector<8x128xf32> -> vector<8x128xf32>
    %c0_96 = arith.constant 0 : index
    %c0_97 = arith.constant 0 : index
    %476 = vector.load %arg9[%c0_96, %c0_97] : memref<1x128xf32, #tpu.memory_space<vmem>>, vector<1x128xf32>
    %477 = vector.broadcast %476 : vector<1x128xf32> to vector<8x128xf32>
    %478 = arith.addf %475, %477 : vector<8x128xf32>
    %c0_98 = arith.constant 0 : index
    %c0_99 = arith.constant 0 : index
    %479 = vector.load %arg10[%c0_98, %c0_99] : memref<8x128xf32, #tpu.memory_space<vmem>>, vector<8x128xf32>
    tpu.vector_store %arg10[%c0_98, %c0_99], %478 {strides = array<i32>} : memref<8x128xf32, #tpu.memory_space<vmem>>, vector<8x128xf32>,
    return
  }
  func.func @transform_0(%arg0: i32) -> (i32, i32) {
    %c0_i32 = arith.constant 0 : i32
    %c0_i32_0 = arith.constant 0 : i32
    %c0_i32_1 = arith.constant 0 : i32
    return %c0_i32, %c0_i32_0 : i32, i32
  }
  func.func @transform_1(%arg0: i32) -> (i32, i32) {
    %c0_i32 = arith.constant 0 : i32
    %c0_i32_0 = arith.constant 0 : i32
    %c0_i32_1 = arith.constant 0 : i32
    return %c0_i32, %c0_i32_0 : i32, i32
  }
  func.func @transform_2(%arg0: i32) -> (i32, i32) {
    %c0_i32 = arith.constant 0 : i32
    %c0_i32_0 = arith.constant 0 : i32
    %c0_i32_1 = arith.constant 0 : i32
    return %c0_i32, %c0_i32_0 : i32, i32
  }
  func.func @transform_3(%arg0: i32) -> (i32, i32) {
    %c0_i32 = arith.constant 0 : i32
    %c0_i32_0 = arith.constant 0 : i32
    %c0_i32_1 = arith.constant 0 : i32
    return %c0_i32, %c0_i32_0 : i32, i32
  }
  func.func @transform_4(%arg0: i32) -> (i32, i32) {
    %c0_i32 = arith.constant 0 : i32
    %c0_i32_0 = arith.constant 0 : i32
    %c0_i32_1 = arith.constant 0 : i32
    return %c0_i32, %c0_i32_0 : i32, i32
  }
  func.func @transform_5(%arg0: i32) -> (i32, i32) {
    %c0_i32 = arith.constant 0 : i32
    %c0_i32_0 = arith.constant 0 : i32
    %c0_i32_1 = arith.constant 0 : i32
    return %c0_i32, %c0_i32_0 : i32, i32
  }
  func.func @transform_6(%arg0: i32) -> (i32, i32) {
    %c0_i32 = arith.constant 0 : i32
    %c0_i32_0 = arith.constant 0 : i32
    %c0_i32_1 = arith.constant 0 : i32
    return %c0_i32, %c0_i32_0 : i32, i32
  }
  func.func @transform_7(%arg0: i32) -> (i32, i32) {
    %c0_i32 = arith.constant 0 : i32
    %c0_i32_0 = arith.constant 0 : i32
    %c0_i32_1 = arith.constant 0 : i32
    return %c0_i32, %c0_i32_0 : i32, i32
  }
  func.func @transform_8(%arg0: i32) -> (i32, i32) {
    %c0_i32 = arith.constant 0 : i32
    %c0_i32_0 = arith.constant 0 : i32
    %c0_i32_1 = arith.constant 0 : i32
    return %c0_i32, %c0_i32_0 : i32, i32
  }
  func.func @transform_9(%arg0: i32) -> (i32, i32) {
    %c0_i32 = arith.constant 0 : i32
    %c0_i32_0 = arith.constant 0 : i32
    %c0_i32_1 = arith.constant 0 : i32
    return %c0_i32, %c0_i32_0 : i32, i32
  }
}

</mosaic_0001>

<llo_original>
// kernel: _lambda_.1
$region0: #{_lambda_.1}
  #allocation0 [shape = 'u32[]', space=smem, size = 0x4, offset = 0x4, fixed_abs, tag = 'smem constant byte address 0x4 - core index']
  #allocation1 [shape = 'u32[144,128]{1,0:T(1,128)}', space=vmem, size = 0x12000, scoped, tag = 'internal scratch']
  #allocation2 [shape = 'f32[64,32]{1,0:T(8,128)}', space=vmem, size = 0x8000, scoped, tag = 'scratch operand']
  %s0 = inlined_call_operand.vmem [shape: f32[64,16], index: 0, kind: input, shape index: {}]
  %s1 = inlined_call_operand.vmem [shape: f32[16,128], index: 1, kind: input, shape index: {}]
  %s2 = inlined_call_operand.vmem [shape: f32[32,128], index: 2, kind: input, shape index: {}]
  %s3 = inlined_call_operand.vmem [shape: f32[1,128], index: 3, kind: input, shape index: {}]
  %s4 = inlined_call_operand.vmem [shape: f32[32,128], index: 4, kind: input, shape index: {}]
  %s5 = inlined_call_operand.vmem [shape: f32[32,128], index: 5, kind: input, shape index: {}]
  %s6 = inlined_call_operand.vmem [shape: f32[1,128], index: 6, kind: input, shape index: {}]
  %s7 = inlined_call_operand.vmem [shape: f32[32,128], index: 7, kind: input, shape index: {}]
  %s8 = inlined_call_operand.vmem [shape: f32[1,128], index: 8, kind: input, shape index: {}]
  %s9 = inlined_call_operand.vmem [shape: f32[8,128], index: 9, kind: output, shape index: {}]
  %s10 = sld [smem:[#allocation0]]
  $region46: #{_lambda_.1} parent=0
    _
  %s12 = ssub.s32 1, %s10
  %s13 = scalar_select 0, %s12, %s10
  // Predicated region
  $region2: #{_lambda_.1} parent=0 // pred_check
    _
  $region3: #{_lambda_.1} parent=0 // pred_check_branch
    %15 = sbr.rel (0) target = $region5
  $region4: #{_lambda_.1} parent=0 // pred_region
    _
  $region5: #{_lambda_.1} parent=0 // pred_fallthru
    _
  // Predicated region
  $region6: #{_lambda_.1} parent=0 // pred_check
    _
  $region7: #{_lambda_.1} parent=0 // pred_check_branch
    %17 = sbr.rel (0) target = $region9
  $region8: #{_lambda_.1} parent=0 // pred_region
    _
  $region9: #{_lambda_.1} parent=0 // pred_fallthru
    _
  // Predicated region
  $region10: #{_lambda_.1} parent=0 // pred_check
    _
  $region11: #{_lambda_.1} parent=0 // pred_check_branch
    %19 = sbr.rel (0) target = $region13
  $region12: #{_lambda_.1} parent=0 // pred_region
    _
  $region13: #{_lambda_.1} parent=0 // pred_fallthru
    _
  // Predicated region
  $region14: #{_lambda_.1} parent=0 // pred_check
    _
  $region15: #{_lambda_.1} parent=0 // pred_check_branch
    %21 = sbr.rel (0) target = $region17
  $region16: #{_lambda_.1} parent=0 // pred_region
    _
  $region17: #{_lambda_.1} parent=0 // pred_fallthru
    _
  // Predicated region
  $region18: #{_lambda_.1} parent=0 // pred_check
    _
  $region19: #{_lambda_.1} parent=0 // pred_check_branch
    %23 = sbr.rel (0) target = $region21
  $region20: #{_lambda_.1} parent=0 // pred_region
    _
  $region21: #{_lambda_.1} parent=0 // pred_fallthru
    _
  // Predicated region
  $region22: #{_lambda_.1} parent=0 // pred_check
    _
  $region23: #{_lambda_.1} parent=0 // pred_check_branch
    %25 = sbr.rel (0) target = $region25
  $region24: #{_lambda_.1} parent=0 // pred_region
    _
  $region25: #{_lambda_.1} parent=0 // pred_fallthru
    _
  // Predicated region
  $region26: #{_lambda_.1} parent=0 // pred_check
    _
  $region27: #{_lambda_.1} parent=0 // pred_check_branch
    %27 = sbr.rel (0) target = $region29
  $region28: #{_lambda_.1} parent=0 // pred_region
    _
  $region29: #{_lambda_.1} parent=0 // pred_fallthru
    _
  // Predicated region
  $region30: #{_lambda_.1} parent=0 // pred_check
    _
  $region31: #{_lambda_.1} parent=0 // pred_check_branch
    %29 = sbr.rel (0) target = $region33
  $region32: #{_lambda_.1} parent=0 // pred_region
    _
  $region33: #{_lambda_.1} parent=0 // pred_fallthru
    _
  // Predicated region
  $region34: #{_lambda_.1} parent=0 // pred_check
    _
  $region35: #{_lambda_.1} parent=0 // pred_check_branch
    %31 = sbr.rel (0) target = $region37
  $region36: #{_lambda_.1} parent=0 // pred_region
    _
  $region37: #{_lambda_.1} parent=0 // pred_fallthru
    _
  %v32 = vld [vmem:[%s0] sm:$0xff]
  %v33 = vld [vmem:[%s0 + $0x8] sm:$0xff]
  %v34 = vld [vmem:[%s0 + $0x10] sm:$0xff]
  %v35 = vld [vmem:[%s0 + $0x18] sm:$0xff]
  %v36 = vld [vmem:[%s0 + $0x20] sm:$0xff]
  %v37 = vld [vmem:[%s0 + $0x28] sm:$0xff]
  %v38 = vld [vmem:[%s0 + $0x30] sm:$0xff]
  %v39 = vld [vmem:[%s0 + $0x38] sm:$0xff]
  %v40 = vld [vmem:[%s1] sm:$0xff]
  %v41 = vld [vmem:[%s1 + $0x8] sm:$0xff]
  %v42 = vld [vmem:[%s3] sm:$0x1]
  %v44 = vlaneseq
  %v45 = vshrl.u32 %v44, 7
  %v46 = vsub.s32 0, %v45
  %v47 = vrot.slane %v42, %v46
  %vm49 = vcmask 130048
  %v51 = vsel %vm49, %v32, 0
  %v54 = vsel %vm49, %v33, 0
  %v57 = vsel %vm49, %v34, 0
  %v60 = vsel %vm49, %v35, 0
  %v63 = vsel %vm49, %v36, 0
  %v66 = vsel %vm49, %v37, 0
  %v69 = vsel %vm49, %v38, 0
  %v72 = vsel %vm49, %v39, 0
  %74 = vmatprep.subr.mxu0 0.0
  %75 = vmatpush1.msra.mxu0 %v40
  %76 = vmatprep.subr.mxu0 0.0
  %77 = vmatpush1.msra.mxu0 %v41
  %78 = vmatprep.subr.mxu0 0.0
  %79 = vmatpush1.msra.mxu0 0.0
  %80 = vmatprep.subr.mxu0 0.0
  %81 = vmatpush1.msra.mxu0 0.0
  %82 = vmatprep.subr.mxu0 0.0
  %83 = vmatpush1.msra.mxu0 0.0
  %84 = vmatprep.subr.mxu0 0.0
  %85 = vmatpush1.msra.mxu0 0.0
  %86 = vmatprep.subr.mxu0 0.0
  %87 = vmatpush1.msra.mxu0 0.0
  %88 = vmatprep.subr.mxu0 0.0
  %89 = vmatpush1.msra.mxu0 0.0
  %90 = vmatprep.subr.mxu0 0.0
  %91 = vmatpush1.msra.mxu0 0.0
  %92 = vmatprep.subr.mxu0 0.0
  %93 = vmatpush1.msra.mxu0 0.0
  %94 = vmatprep.subr.mxu0 0.0
  %95 = vmatpush1.msra.mxu0 0.0
  %96 = vmatprep.subr.mxu0 0.0
  %97 = vmatpush1.msra.mxu0 0.0
  %98 = vmatprep.subr.mxu0 0.0
  %99 = vmatpush1.msra.mxu0 0.0
  %100 = vmatprep.subr.mxu0 0.0
  %101 = vmatpush1.msra.mxu0 0.0
  %102 = vmatprep.subr.mxu0 0.0
  %103 = vmatpush1.msra.mxu0 0.0
  %104 = vmatprep.subr.mxu0 0.0
  %105 = vmatpush1.msra.mxu0 0.0
  %106 = vmatprep.subr.mxu0 0.0
  %107 = vmatpush1.msra.mxu0 0.0
  %108 = vmatprep.subr.mxu0 0.0
  %109 = vmatpush1.msra.mxu0 0.0
  %110 = vmatprep.subr.mxu0 0.0
  %111 = vmatpush1.msra.mxu0 0.0
  %112 = vmatprep.subr.mxu0 0.0
  %113 = vmatpush1.msra.mxu0 0.0
  %114 = vmatprep.subr.mxu0 0.0
  %115 = vmatpush1.msra.mxu0 0.0
  %116 = vmatprep.subr.mxu0 0.0
  %117 = vmatpush1.msra.mxu0 0.0
  %118 = vmatprep.subr.mxu0 0.0
  %119 = vmatpush1.msra.mxu0 0.0
  %120 = vmatprep.subr.mxu0 0.0
  %121 = vmatpush1.msra.mxu0 0.0
  %122 = vmatprep.subr.mxu0 0.0
  %123 = vmatpush1.msra.mxu0 0.0
  %124 = vmatprep.subr.mxu0 0.0
  %125 = vmatpush1.msra.mxu0 0.0
  %126 = vmatprep.subr.mxu0 0.0
  %127 = vmatpush1.msra.mxu0 0.0
  %128 = vmatprep.subr.mxu0 0.0
  %129 = vmatpush1.msra.mxu0 0.0
  %130 = vmatprep.subr.mxu0 0.0
  %131 = vmatpush1.msra.mxu0 0.0
  %132 = vmatprep.subr.mxu0 0.0
  %133 = vmatpush1.msra.mxu0 0.0
  %134 = vmatprep.subr.mxu0 0.0
  %135 = vmatpush1.msra.mxu0 0.0
  %136 = vmatprep.subr.mxu0 0.0
  %137 = vmatpush1.msra.mxu0 0.0
  %138 = vmatprep.mubr.f32.mxu0 0.0
  %139 = vmatmul.mubr.f32.gmra.mrb[0].mxu0 %v51
  %v140 = vpop.f32.mrb[0].mxu0
  %v141 = vadd.f32 %v47, %v140
  %v142 = vpop.f32.mrb[0].mxu0
  %143 = vmatprep.mubr.f32.mxu0 0.0
  %144 = vmatmul.mubr.f32.gmra.mrb[0].mxu0 %v54
  %v145 = vpop.f32.mrb[0].mxu0
  %v146 = vadd.f32 %v47, %v145
  %v147 = vpop.f32.mrb[0].mxu0
  %148 = vmatprep.mubr.f32.mxu0 0.0
  %149 = vmatmul.mubr.f32.gmra.mrb[0].mxu0 %v57
  %v150 = vpop.f32.mrb[0].mxu0
  %v151 = vadd.f32 %v47, %v150
  %v152 = vpop.f32.mrb[0].mxu0
  %153 = vmatprep.mubr.f32.mxu0 0.0
  %154 = vmatmul.mubr.f32.gmra.mrb[0].mxu0 %v60
  %v155 = vpop.f32.mrb[0].mxu0
  %v156 = vadd.f32 %v47, %v155
  %v157 = vpop.f32.mrb[0].mxu0
  %158 = vmatprep.mubr.f32.mxu0 0.0
  %159 = vmatmul.mubr.f32.gmra.mrb[0].mxu0 %v63
  %v160 = vpop.f32.mrb[0].mxu0
  %v161 = vadd.f32 %v47, %v160
  %v162 = vpop.f32.mrb[0].mxu0
  %163 = vmatprep.mubr.f32.mxu0 0.0
  %164 = vmatmul.mubr.f32.gmra.mrb[0].mxu0 %v66
  %v165 = vpop.f32.mrb[0].mxu0
  %v166 = vadd.f32 %v47, %v165
  %v167 = vpop.f32.mrb[0].mxu0
  %168 = vmatprep.mubr.f32.mxu0 0.0
  %169 = vmatmul.mubr.f32.gmra.mrb[0].mxu0 %v69
  %v170 = vpop.f32.mrb[0].mxu0
  %v171 = vadd.f32 %v47, %v170
  %v172 = vpop.f32.mrb[0].mxu0
  %173 = vmatprep.mubr.f32.mxu0 0.0
  %174 = vmatmul.mubr.f32.gmra.mrb[0].mxu0 %v72
  %v175 = vpop.f32.mrb[0].mxu0
  %v176 = vadd.f32 %v47, %v175
  %v177 = vpop.f32.mrb[0].mxu0
  %178 = vdwg.mxu0
  %v179 = vld [vmem:[%s2] sm:$0xff]
  %v180 = vld [vmem:[%s2 + $0x8] sm:$0xff]
  %v181 = vld [vmem:[%s2 + $0x10] sm:$0xff]
  %v182 = vld [vmem:[%s2 + $0x18] sm:$0xff]
  %vm183 = vcmask 261120
  %v185 = vsel %vm183, 0.0, 0
  %187 = vmatprep.subr.mxu0 0.0
  %188 = vmatpush1.msra.mxu0 %v179
  %189 = vmatprep.subr.mxu0 0.0
  %190 = vmatpush1.msra.mxu0 %v180
  %191 = vmatprep.subr.mxu0 0.0
  %192 = vmatpush1.msra.mxu0 %v181
  %193 = vmatprep.subr.mxu0 0.0
  %194 = vmatpush1.msra.mxu0 %v182
  %195 = vmatprep.subr.mxu0 0.0
  %196 = vmatpush1.msra.mxu0 0.0
  %197 = vmatprep.subr.mxu0 0.0
  %198 = vmatpush1.msra.mxu0 0.0
  %199 = vmatprep.subr.mxu0 0.0
  %200 = vmatpush1.msra.mxu0 0.0
  %201 = vmatprep.subr.mxu0 0.0
  %202 = vmatpush1.msra.mxu0 0.0
  %203 = vmatprep.subr.mxu0 0.0
  %204 = vmatpush1.msra.mxu0 0.0
  %205 = vmatprep.subr.mxu0 0.0
  %206 = vmatpush1.msra.mxu0 0.0
  %207 = vmatprep.subr.mxu0 0.0
  %208 = vmatpush1.msra.mxu0 0.0
  %209 = vmatprep.subr.mxu0 0.0
  %210 = vmatpush1.msra.mxu0 0.0
  %211 = vmatprep.subr.mxu0 0.0
  %212 = vmatpush1.msra.mxu0 0.0
  %213 = vmatprep.subr.mxu0 0.0
  %214 = vmatpush1.msra.mxu0 0.0
  %215 = vmatprep.subr.mxu0 0.0
  %216 = vmatpush1.msra.mxu0 0.0
  %217 = vmatprep.subr.mxu0 0.0
  %218 = vmatpush1.msra.mxu0 0.0
  %219 = vmatprep.subr.mxu0 0.0
  %220 = vmatpush1.msra.mxu0 0.0
  %221 = vmatprep.subr.mxu0 0.0
  %222 = vmatpush1.msra.mxu0 0.0
  %223 = vmatprep.subr.mxu0 0.0
  %224 = vmatpush1.msra.mxu0 0.0
  %225 = vmatprep.subr.mxu0 0.0
  %226 = vmatpush1.msra.mxu0 0.0
  %227 = vmatprep.subr.mxu0 0.0
  %228 = vmatpush1.msra.mxu0 0.0
  %229 = vmatprep.subr.mxu0 0.0
  %230 = vmatpush1.msra.mxu0 0.0
  %231 = vmatprep.subr.mxu0 0.0
  %232 = vmatpush1.msra.mxu0 0.0
  %233 = vmatprep.subr.mxu0 0.0
  %234 = vmatpush1.msra.mxu0 0.0
  %235 = vmatprep.subr.mxu0 0.0
  %236 = vmatpush1.msra.mxu0 0.0
  %237 = vmatprep.subr.mxu0 0.0
  %238 = vmatpush1.msra.mxu0 0.0
  %239 = vmatprep.subr.mxu0 0.0
  %240 = vmatpush1.msra.mxu0 0.0
  %241 = vmatprep.subr.mxu0 0.0
  %242 = vmatpush1.msra.mxu0 0.0
  %243 = vmatprep.subr.mxu0 0.0
  %244 = vmatpush1.msra.mxu0 0.0
  %245 = vmatprep.subr.mxu0 0.0
  %246 = vmatpush1.msra.mxu0 0.0
  %247 = vmatprep.subr.mxu0 0.0
  %248 = vmatpush1.msra.mxu0 0.0
  %249 = vmatprep.subr.mxu0 0.0
  %250 = vmatpush1.msra.mxu0 0.0
  %251 = vmatprep.mubr.f32.mxu0 0.0
  %252 = vmatmul.mubr.f32.gmra.mrb[0].mxu0 %v185
  %v253 = vpop.f32.mrb[0].mxu0
  %v254 = vadd.f32 0.0, %v253
  %v255 = vpop.f32.mrb[0].mxu0
  %256 = vdwg.mxu0
  %v257 = vadd.f32 %v141, %v254
  %v258 = vxor.u32 %v257, 2147483648
  %v259 = vmul.f32 %v258, 1.442695
  %v260 = vpow.pop %v259
  %v261 = vadd.f32 %v260, 1.0
  %v262 = vrcp.pop %v261
  %v263 = vmul.f32 1.0, %v262
  %v264 = vtanh.pop %v257
  %v265 = vmul.f32 %v263, 0.0
  %267 = vrot.lane.b32.xlu0 %v264, 64
  %v268 = vpop.permute.xlu0 %267
  %v270 = vmul.f32 %v263, %v268
  %272 = vrot.lane.b32.xlu0 %v270, 32
  %v273 = vpop.permute.xlu0 %272
  %v275 = vadd.f32 %v265, %v273
  %v276 = vtanh.pop %v275
  %278 = vrot.lane.b32.xlu0 %v276, 64
  %v279 = vpop.permute.xlu0 %278
  %v281 = vmul.f32 %v263, %v279
  %283 = vrot.lane.b32.xlu0 %v281, 32
  %v284 = vpop.permute.xlu0 %283
  %286 = vst.msk [vmem:[#allocation2] sm:$0xff] %vm183, %v284
  %v287 = vsel %vm183, %v284, 0
  %289 = vmatprep.subr.mxu0 0.0
  %290 = vmatpush1.msra.mxu0 %v179
  %291 = vmatprep.subr.mxu0 0.0
  %292 = vmatpush1.msra.mxu0 %v180
  %293 = vmatprep.subr.mxu0 0.0
  %294 = vmatpush1.msra.mxu0 %v181
  %295 = vmatprep.subr.mxu0 0.0
  %296 = vmatpush1.msra.mxu0 %v182
  %297 = vmatprep.subr.mxu0 0.0
  %298 = vmatpush1.msra.mxu0 0.0
  %299 = vmatprep.subr.mxu0 0.0
  %300 = vmatpush1.msra.mxu0 0.0
  %301 = vmatprep.subr.mxu0 0.0
  %302 = vmatpush1.msra.mxu0 0.0
  %303 = vmatprep.subr.mxu0 0.0
  %304 = vmatpush1.msra.mxu0 0.0
  %305 = vmatprep.subr.mxu0 0.0
  %306 = vmatpush1.msra.mxu0 0.0
  %307 = vmatprep.subr.mxu0 0.0
  %308 = vmatpush1.msra.mxu0 0.0
  %309 = vmatprep.subr.mxu0 0.0
  %310 = vmatpush1.msra.mxu0 0.0
  %311 = vmatprep.subr.mxu0 0.0
  %312 = vmatpush1.msra.mxu0 0.0
  %313 = vmatprep.subr.mxu0 0.0
  %314 = vmatpush1.msra.mxu0 0.0
  %315 = vmatprep.subr.mxu0 0.0
  %316 = vmatpush1.msra.mxu0 0.0
  %317 = vmatprep.subr.mxu0 0.0
  %318 = vmatpush1.msra.mxu0 0.0
  %319 = vmatprep.subr.mxu0 0.0
  %320 = vmatpush1.msra.mxu0 0.0
  %321 = vmatprep.subr.mxu0 0.0
  %322 = vmatpush1.msra.mxu0 0.0
  %323 = vmatprep.subr.mxu0 0.0
  %324 = vmatpush1.msra.mxu0 0.0
  %325 = vmatprep.subr.mxu0 0.0
  %326 = vmatpush1.msra.mxu0 0.0
  %327 = vmatprep.subr.mxu0 0.0
  %328 = vmatpush1.msra.mxu0 0.0
  %329 = vmatprep.subr.mxu0 0.0
  %330 = vmatpush1.msra.mxu0 0.0
  %331 = vmatprep.subr.mxu0 0.0
  %332 = vmatpush1.msra.mxu0 0.0
  %333 = vmatprep.subr.mxu0 0.0
  %334 = vmatpush1.msra.mxu0 0.0
  %335 = vmatprep.subr.mxu0 0.0
  %336 = vmatpush1.msra.mxu0 0.0
  %337 = vmatprep.subr.mxu0 0.0
  %338 = vmatpush1.msra.mxu0 0.0
  %339 = vmatprep.subr.mxu0 0.0
  %340 = vmatpush1.msra.mxu0 0.0
  %341 = vmatprep.subr.mxu0 0.0
  %342 = vmatpush1.msra.mxu0 0.0
  %343 = vmatprep.subr.mxu0 0.0
  %344 = vmatpush1.msra.mxu0 0.0
  %345 = vmatprep.subr.mxu0 0.0
  %346 = vmatpush1.msra.mxu0 0.0
  %347 = vmatprep.subr.mxu0 0.0
  %348 = vmatpush1.msra.mxu0 0.0
  %349 = vmatprep.subr.mxu0 0.0
  %350 = vmatpush1.msra.mxu0 0.0
  %351 = vmatprep.subr.mxu0 0.0
  %352 = vmatpush1.msra.mxu0 0.0
  %353 = vmatprep.mubr.f32.mxu0 0.0
  %354 = vmatmul.mubr.f32.gmra.mrb[0].mxu0 %v287
  %v355 = vpop.f32.mrb[0].mxu0
  %v356 = vadd.f32 0.0, %v355
  %v357 = vpop.f32.mrb[0].mxu0
  %358 = vdwg.mxu0
  %v359 = vadd.f32 %v146, %v356
  %v360 = vxor.u32 %v359, 2147483648
  %v361 = vmul.f32 %v360, 1.442695
  %v362 = vpow.pop %v361
  %v363 = vadd.f32 %v362, 1.0
  %v364 = vrcp.pop %v363
  %v365 = vmul.f32 1.0, %v364
  %v366 = vtanh.pop %v359
  %v367 = vmul.f32 %v365, %v275
  %369 = vrot.lane.b32.xlu0 %v366, 64
  %v370 = vpop.permute.xlu0 %369
  %v372 = vmul.f32 %v365, %v370
  %374 = vrot.lane.b32.xlu0 %v372, 32
  %v375 = vpop.permute.xlu0 %374
  %v377 = vadd.f32 %v367, %v375
  %v378 = vtanh.pop %v377
  %380 = vrot.lane.b32.xlu0 %v378, 64
  %v381 = vpop.permute.xlu0 %380
  %v383 = vmul.f32 %v365, %v381
  %385 = vrot.lane.b32.xlu0 %v383, 32
  %v386 = vpop.permute.xlu0 %385
  %388 = vst.msk [vmem:[#allocation2 + $0x8] sm:$0xff] %vm183, %v386
  %v389 = vsel %vm183, %v386, 0
  %391 = vmatprep.subr.mxu0 0.0
  %392 = vmatpush1.msra.mxu0 %v179
  %393 = vmatprep.subr.mxu0 0.0
  %394 = vmatpush1.msra.mxu0 %v180
  %395 = vmatprep.subr.mxu0 0.0
  %396 = vmatpush1.msra.mxu0 %v181
  %397 = vmatprep.subr.mxu0 0.0
  %398 = vmatpush1.msra.mxu0 %v182
  %399 = vmatprep.subr.mxu0 0.0
  %400 = vmatpush1.msra.mxu0 0.0
  %401 = vmatprep.subr.mxu0 0.0
  %402 = vmatpush1.msra.mxu0 0.0
  %403 = vmatprep.subr.mxu0 0.0
  %404 = vmatpush1.msra.mxu0 0.0
  %405 = vmatprep.subr.mxu0 0.0
  %406 = vmatpush1.msra.mxu0 0.0
  %407 = vmatprep.subr.mxu0 0.0
  %408 = vmatpush1.msra.mxu0 0.0
  %409 = vmatprep.subr.mxu0 0.0
  %410 = vmatpush1.msra.mxu0 0.0
  %411 = vmatprep.subr.mxu0 0.0
  %412 = vmatpush1.msra.mxu0 0.0
  %413 = vmatprep.subr.mxu0 0.0
  %414 = vmatpush1.msra.mxu0 0.0
  %415 = vmatprep.subr.mxu0 0.0
  %416 = vmatpush1.msra.mxu0 0.0
  %417 = vmatprep.subr.mxu0 0.0
  %418 = vmatpush1.msra.mxu0 0.0
  %419 = vmatprep.subr.mxu0 0.0
  %420 = vmatpush1.msra.mxu0 0.0
  %421 = vmatprep.subr.mxu0 0.0
  %422 = vmatpush1.msra.mxu0 0.0
  %423 = vmatprep.subr.mxu0 0.0
  %424 = vmatpush1.msra.mxu0 0.0
  %425 = vmatprep.subr.mxu0 0.0
  %426 = vmatpush1.msra.mxu0 0.0
  %427 = vmatprep.subr.mxu0 0.0
  %428 = vmatpush1.msra.mxu0 0.0
  %429 = vmatprep.subr.mxu0 0.0
  %430 = vmatpush1.msra.mxu0 0.0
  %431 = vmatprep.subr.mxu0 0.0
  %432 = vmatpush1.msra.mxu0 0.0
  %433 = vmatprep.subr.mxu0 0.0
  %434 = vmatpush1.msra.mxu0 0.0
  %435 = vmatprep.subr.mxu0 0.0
  %436 = vmatpush1.msra.mxu0 0.0
  %437 = vmatprep.subr.mxu0 0.0
  %438 = vmatpush1.msra.mxu0 0.0
  %439 = vmatprep.subr.mxu0 0.0
  %440 = vmatpush1.msra.mxu0 0.0
  %441 = vmatprep.subr.mxu0 0.0
  %442 = vmatpush1.msra.mxu0 0.0
  %443 = vmatprep.subr.mxu0 0.0
  %444 = vmatpush1.msra.mxu0 0.0
  %445 = vmatprep.subr.mxu0 0.0
  %446 = vmatpush1.msra.mxu0 0.0
  %447 = vmatprep.subr.mxu0 0.0
  %448 = vmatpush1.msra.mxu0 0.0
  %449 = vmatprep.subr.mxu0 0.0
  %450 = vmatpush1.msra.mxu0 0.0
  %451 = vmatprep.subr.mxu0 0.0
  %452 = vmatpush1.msra.mxu0 0.0
  %453 = vmatprep.subr.mxu0 0.0
  %454 = vmatpush1.msra.mxu0 0.0
  %455 = vmatprep.mubr.f32.mxu0 0.0
  %456 = vmatmul.mubr.f32.gmra.mrb[0].mxu0 %v389
  %v457 = vpop.f32.mrb[0].mxu0
  %v458 = vadd.f32 0.0, %v457
  %v459 = vpop.f32.mrb[0].mxu0
  %460 = vdwg.mxu0
  %v461 = vadd.f32 %v151, %v458
  %v462 = vxor.u32 %v461, 2147483648
  %v463 = vmul.f32 %v462, 1.442695
  %v464 = vpow.pop %v463
  %v465 = vadd.f32 %v464, 1.0
  %v466 = vrcp.pop %v465
  %v467 = vmul.f32 1.0, %v466
  %v468 = vtanh.pop %v461
  %v469 = vmul.f32 %v467, %v377
  %471 = vrot.lane.b32.xlu0 %v468, 64
  %v472 = vpop.permute.xlu0 %471
  %v474 = vmul.f32 %v467, %v472
  %476 = vrot.lane.b32.xlu0 %v474, 32
  %v477 = vpop.permute.xlu0 %476
  %v479 = vadd.f32 %v469, %v477
  %v480 = vtanh.pop %v479
  %482 = vrot.lane.b32.xlu0 %v480, 64
  %v483 = vpop.permute.xlu0 %482
  %v485 = vmul.f32 %v467, %v483
  %487 = vrot.lane.b32.xlu0 %v485, 32
  %v488 = vpop.permute.xlu0 %487
  %490 = vst.msk [vmem:[#allocation2 + $0x10] sm:$0xff] %vm183, %v488
  %v491 = vsel %vm183, %v488, 0
  %493 = vmatprep.subr.mxu0 0.0
  %494 = vmatpush1.msra.mxu0 %v179
  %495 = vmatprep.subr.mxu0 0.0
  %496 = vmatpush1.msra.mxu0 %v180
  %497 = vmatprep.subr.mxu0 0.0
  %498 = vmatpush1.msra.mxu0 %v181
  %499 = vmatprep.subr.mxu0 0.0
  %500 = vmatpush1.msra.mxu0 %v182
  %501 = vmatprep.subr.mxu0 0.0
  %502 = vmatpush1.msra.mxu0 0.0
  %503 = vmatprep.subr.mxu0 0.0
  %504 = vmatpush1.msra.mxu0 0.0
  %505 = vmatprep.subr.mxu0 0.0
  %506 = vmatpush1.msra.mxu0 0.0
  %507 = vmatprep.subr.mxu0 0.0
  %508 = vmatpush1.msra.mxu0 0.0
  %509 = vmatprep.subr.mxu0 0.0
  %510 = vmatpush1.msra.mxu0 0.0
  %511 = vmatprep.subr.mxu0 0.0
  %512 = vmatpush1.msra.mxu0 0.0
  %513 = vmatprep.subr.mxu0 0.0
  %514 = vmatpush1.msra.mxu0 0.0
  %515 = vmatprep.subr.mxu0 0.0
  %516 = vmatpush1.msra.mxu0 0.0
  %517 = vmatprep.subr.mxu0 0.0
  %518 = vmatpush1.msra.mxu0 0.0
  %519 = vmatprep.subr.mxu0 0.0
  %520 = vmatpush1.msra.mxu0 0.0
  %521 = vmatprep.subr.mxu0 0.0
  %522 = vmatpush1.msra.mxu0 0.0
  %523 = vmatprep.subr.mxu0 0.0
  %524 = vmatpush1.msra.mxu0 0.0
  %525 = vmatprep.subr.mxu0 0.0
  %526 = vmatpush1.msra.mxu0 0.0
  %527 = vmatprep.subr.mxu0 0.0
  %528 = vmatpush1.msra.mxu0 0.0
  %529 = vmatprep.subr.mxu0 0.0
  %530 = vmatpush1.msra.mxu0 0.0
  %531 = vmatprep.subr.mxu0 0.0
  %532 = vmatpush1.msra.mxu0 0.0
  %533 = vmatprep.subr.mxu0 0.0
  %534 = vmatpush1.msra.mxu0 0.0
  %535 = vmatprep.subr.mxu0 0.0
  %536 = vmatpush1.msra.mxu0 0.0
  %537 = vmatprep.subr.mxu0 0.0
  %538 = vmatpush1.msra.mxu0 0.0
  %539 = vmatprep.subr.mxu0 0.0
  %540 = vmatpush1.msra.mxu0 0.0
  %541 = vmatprep.subr.mxu0 0.0
  %542 = vmatpush1.msra.mxu0 0.0
  %543 = vmatprep.subr.mxu0 0.0
  %544 = vmatpush1.msra.mxu0 0.0
  %545 = vmatprep.subr.mxu0 0.0
  %546 = vmatpush1.msra.mxu0 0.0
  %547 = vmatprep.subr.mxu0 0.0
  %548 = vmatpush1.msra.mxu0 0.0
  %549 = vmatprep.subr.mxu0 0.0
  %550 = vmatpush1.msra.mxu0 0.0
  %551 = vmatprep.subr.mxu0 0.0
  %552 = vmatpush1.msra.mxu0 0.0
  %553 = vmatprep.subr.mxu0 0.0
  %554 = vmatpush1.msra.mxu0 0.0
  %555 = vmatprep.subr.mxu0 0.0
  %556 = vmatpush1.msra.mxu0 0.0
  %557 = vmatprep.mubr.f32.mxu0 0.0
  %558 = vmatmul.mubr.f32.gmra.mrb[0].mxu0 %v491
  %v559 = vpop.f32.mrb[0].mxu0
  %v560 = vadd.f32 0.0, %v559
  %v561 = vpop.f32.mrb[0].mxu0
  %562 = vdwg.mxu0
  %v563 = vadd.f32 %v156, %v560
  %v564 = vxor.u32 %v563, 2147483648
  %v565 = vmul.f32 %v564, 1.442695
  %v566 = vpow.pop %v565
  %v567 = vadd.f32 %v566, 1.0
  %v568 = vrcp.pop %v567
  %v569 = vmul.f32 1.0, %v568
  %v570 = vtanh.pop %v563
  %v571 = vmul.f32 %v569, %v479
  %573 = vrot.lane.b32.xlu0 %v570, 64
  %v574 = vpop.permute.xlu0 %573
  %v576 = vmul.f32 %v569, %v574
  %578 = vrot.lane.b32.xlu0 %v576, 32
  %v579 = vpop.permute.xlu0 %578
  %v581 = vadd.f32 %v571, %v579
  %v582 = vtanh.pop %v581
  %584 = vrot.lane.b32.xlu0 %v582, 64
  %v585 = vpop.permute.xlu0 %584
  %v587 = vmul.f32 %v569, %v585
  %589 = vrot.lane.b32.xlu0 %v587, 32
  %v590 = vpop.permute.xlu0 %589
  %592 = vst.msk [vmem:[#allocation2 + $0x18] sm:$0xff] %vm183, %v590
  %v593 = vsel %vm183, %v590, 0
  %595 = vmatprep.subr.mxu0 0.0
  %596 = vmatpush1.msra.mxu0 %v179
  %597 = vmatprep.subr.mxu0 0.0
  %598 = vmatpush1.msra.mxu0 %v180
  %599 = vmatprep.subr.mxu0 0.0
  %600 = vmatpush1.msra.mxu0 %v181
  %601 = vmatprep.subr.mxu0 0.0
  %602 = vmatpush1.msra.mxu0 %v182
  %603 = vmatprep.subr.mxu0 0.0
  %604 = vmatpush1.msra.mxu0 0.0
  %605 = vmatprep.subr.mxu0 0.0
  %606 = vmatpush1.msra.mxu0 0.0
  %607 = vmatprep.subr.mxu0 0.0
  %608 = vmatpush1.msra.mxu0 0.0
  %609 = vmatprep.subr.mxu0 0.0
  %610 = vmatpush1.msra.mxu0 0.0
  %611 = vmatprep.subr.mxu0 0.0
  %612 = vmatpush1.msra.mxu0 0.0
  %613 = vmatprep.subr.mxu0 0.0
  %614 = vmatpush1.msra.mxu0 0.0
  %615 = vmatprep.subr.mxu0 0.0
  %616 = vmatpush1.msra.mxu0 0.0
  %617 = vmatprep.subr.mxu0 0.0
  %618 = vmatpush1.msra.mxu0 0.0
  %619 = vmatprep.subr.mxu0 0.0
  %620 = vmatpush1.msra.mxu0 0.0
  %621 = vmatprep.subr.mxu0 0.0
  %622 = vmatpush1.msra.mxu0 0.0
  %623 = vmatprep.subr.mxu0 0.0
  %624 = vmatpush1.msra.mxu0 0.0
  %625 = vmatprep.subr.mxu0 0.0
  %626 = vmatpush1.msra.mxu0 0.0
  %627 = vmatprep.subr.mxu0 0.0
  %628 = vmatpush1.msra.mxu0 0.0
  %629 = vmatprep.subr.mxu0 0.0
  %630 = vmatpush1.msra.mxu0 0.0
  %631 = vmatprep.subr.mxu0 0.0
  %632 = vmatpush1.msra.mxu0 0.0
  %633 = vmatprep.subr.mxu0 0.0
  %634 = vmatpush1.msra.mxu0 0.0
  %635 = vmatprep.subr.mxu0 0.0
  %636 = vmatpush1.msra.mxu0 0.0
  %637 = vmatprep.subr.mxu0 0.0
  %638 = vmatpush1.msra.mxu0 0.0
  %639 = vmatprep.subr.mxu0 0.0
  %640 = vmatpush1.msra.mxu0 0.0
  %641 = vmatprep.subr.mxu0 0.0
  %642 = vmatpush1.msra.mxu0 0.0
  %643 = vmatprep.subr.mxu0 0.0
  %644 = vmatpush1.msra.mxu0 0.0
  %645 = vmatprep.subr.mxu0 0.0
  %646 = vmatpush1.msra.mxu0 0.0
  %647 = vmatprep.subr.mxu0 0.0
  %648 = vmatpush1.msra.mxu0 0.0
  %649 = vmatprep.subr.mxu0 0.0
  %650 = vmatpush1.msra.mxu0 0.0
  %651 = vmatprep.subr.mxu0 0.0
  %652 = vmatpush1.msra.mxu0 0.0
  %653 = vmatprep.subr.mxu0 0.0
  %654 = vmatpush1.msra.mxu0 0.0
  %655 = vmatprep.subr.mxu0 0.0
  %656 = vmatpush1.msra.mxu0 0.0
  %657 = vmatprep.subr.mxu0 0.0
  %658 = vmatpush1.msra.mxu0 0.0
  %659 = vmatprep.mubr.f32.mxu0 0.0
  %660 = vmatmul.mubr.f32.gmra.mrb[0].mxu0 %v593
  %v661 = vpop.f32.mrb[0].mxu0
  %v662 = vadd.f32 0.0, %v661
  %v663 = vpop.f32.mrb[0].mxu0
  %664 = vdwg.mxu0
  %v665 = vadd.f32 %v161, %v662
  %v666 = vxor.u32 %v665, 2147483648
  %v667 = vmul.f32 %v666, 1.442695
  %v668 = vpow.pop %v667
  %v669 = vadd.f32 %v668, 1.0
  %v670 = vrcp.pop %v669
  %v671 = vmul.f32 1.0, %v670
  %v672 = vtanh.pop %v665
  %v673 = vmul.f32 %v671, %v581
  %675 = vrot.lane.b32.xlu0 %v672, 64
  %v676 = vpop.permute.xlu0 %675
  %v678 = vmul.f32 %v671, %v676
  %680 = vrot.lane.b32.xlu0 %v678, 32
  %v681 = vpop.permute.xlu0 %680
  %v683 = vadd.f32 %v673, %v681
  %v684 = vtanh.pop %v683
  %686 = vrot.lane.b32.xlu0 %v684, 64
  %v687 = vpop.permute.xlu0 %686
  %v689 = vmul.f32 %v671, %v687
  %691 = vrot.lane.b32.xlu0 %v689, 32
  %v692 = vpop.permute.xlu0 %691
  %694 = vst.msk [vmem:[#allocation2 + $0x20] sm:$0xff] %vm183, %v692
  %v695 = vsel %vm183, %v692, 0
  %697 = vmatprep.subr.mxu0 0.0
  %698 = vmatpush1.msra.mxu0 %v179
  %699 = vmatprep.subr.mxu0 0.0
  %700 = vmatpush1.msra.mxu0 %v180
  %701 = vmatprep.subr.mxu0 0.0
  %702 = vmatpush1.msra.mxu0 %v181
  %703 = vmatprep.subr.mxu0 0.0
  %704 = vmatpush1.msra.mxu0 %v182
  %705 = vmatprep.subr.mxu0 0.0
  %706 = vmatpush1.msra.mxu0 0.0
  %707 = vmatprep.subr.mxu0 0.0
  %708 = vmatpush1.msra.mxu0 0.0
  %709 = vmatprep.subr.mxu0 0.0
  %710 = vmatpush1.msra.mxu0 0.0
  %711 = vmatprep.subr.mxu0 0.0
  %712 = vmatpush1.msra.mxu0 0.0
  %713 = vmatprep.subr.mxu0 0.0
  %714 = vmatpush1.msra.mxu0 0.0
  %715 = vmatprep.subr.mxu0 0.0
  %716 = vmatpush1.msra.mxu0 0.0
  %717 = vmatprep.subr.mxu0 0.0
  %718 = vmatpush1.msra.mxu0 0.0
  %719 = vmatprep.subr.mxu0 0.0
  %720 = vmatpush1.msra.mxu0 0.0
  %721 = vmatprep.subr.mxu0 0.0
  %722 = vmatpush1.msra.mxu0 0.0
  %723 = vmatprep.subr.mxu0 0.0
  %724 = vmatpush1.msra.mxu0 0.0
  %725 = vmatprep.subr.mxu0 0.0
  %726 = vmatpush1.msra.mxu0 0.0
  %727 = vmatprep.subr.mxu0 0.0
  %728 = vmatpush1.msra.mxu0 0.0
  %729 = vmatprep.subr.mxu0 0.0
  %730 = vmatpush1.msra.mxu0 0.0
  %731 = vmatprep.subr.mxu0 0.0
  %732 = vmatpush1.msra.mxu0 0.0
  %733 = vmatprep.subr.mxu0 0.0
  %734 = vmatpush1.msra.mxu0 0.0
  %735 = vmatprep.subr.mxu0 0.0
  %736 = vmatpush1.msra.mxu0 0.0
  %737 = vmatprep.subr.mxu0 0.0
  %738 = vmatpush1.msra.mxu0 0.0
  %739 = vmatprep.subr.mxu0 0.0
  %740 = vmatpush1.msra.mxu0 0.0
  %741 = vmatprep.subr.mxu0 0.0
  %742 = vmatpush1.msra.mxu0 0.0
  %743 = vmatprep.subr.mxu0 0.0
  %744 = vmatpush1.msra.mxu0 0.0
  %745 = vmatprep.subr.mxu0 0.0
  %746 = vmatpush1.msra.mxu0 0.0
  %747 = vmatprep.subr.mxu0 0.0
  %748 = vmatpush1.msra.mxu0 0.0
  %749 = vmatprep.subr.mxu0 0.0
  %750 = vmatpush1.msra.mxu0 0.0
  %751 = vmatprep.subr.mxu0 0.0
  %752 = vmatpush1.msra.mxu0 0.0
  %753 = vmatprep.subr.mxu0 0.0
  %754 = vmatpush1.msra.mxu0 0.0
  %755 = vmatprep.subr.mxu0 0.0
  %756 = vmatpush1.msra.mxu0 0.0
  %757 = vmatprep.subr.mxu0 0.0
  %758 = vmatpush1.msra.mxu0 0.0
  %759 = vmatprep.subr.mxu0 0.0
  %760 = vmatpush1.msra.mxu0 0.0
  %761 = vmatprep.mubr.f32.mxu0 0.0
  %762 = vmatmul.mubr.f32.gmra.mrb[0].mxu0 %v695
  %v763 = vpop.f32.mrb[0].mxu0
  %v764 = vadd.f32 0.0, %v763
  %v765 = vpop.f32.mrb[0].mxu0
  %766 = vdwg.mxu0
  %v767 = vadd.f32 %v166, %v764
  %v768 = vxor.u32 %v767, 2147483648
  %v769 = vmul.f32 %v768, 1.442695
  %v770 = vpow.pop %v769
  %v771 = vadd.f32 %v770, 1.0
  %v772 = vrcp.pop %v771
  %v773 = vmul.f32 1.0, %v772
  %v774 = vtanh.pop %v767
  %v775 = vmul.f32 %v773, %v683
  %777 = vrot.lane.b32.xlu0 %v774, 64
  %v778 = vpop.permute.xlu0 %777
  %v780 = vmul.f32 %v773, %v778
  %782 = vrot.lane.b32.xlu0 %v780, 32
  %v783 = vpop.permute.xlu0 %782
  %v785 = vadd.f32 %v775, %v783
  %v786 = vtanh.pop %v785
  %788 = vrot.lane.b32.xlu0 %v786, 64
  %v789 = vpop.permute.xlu0 %788
  %v791 = vmul.f32 %v773, %v789
  %793 = vrot.lane.b32.xlu0 %v791, 32
  %v794 = vpop.permute.xlu0 %793
  %796 = vst.msk [vmem:[#allocation2 + $0x28] sm:$0xff] %vm183, %v794
  %v797 = vsel %vm183, %v794, 0
  %799 = vmatprep.subr.mxu0 0.0
  %800 = vmatpush1.msra.mxu0 %v179
  %801 = vmatprep.subr.mxu0 0.0
  %802 = vmatpush1.msra.mxu0 %v180
  %803 = vmatprep.subr.mxu0 0.0
  %804 = vmatpush1.msra.mxu0 %v181
  %805 = vmatprep.subr.mxu0 0.0
  %806 = vmatpush1.msra.mxu0 %v182
  %807 = vmatprep.subr.mxu0 0.0
  %808 = vmatpush1.msra.mxu0 0.0
  %809 = vmatprep.subr.mxu0 0.0
  %810 = vmatpush1.msra.mxu0 0.0
  %811 = vmatprep.subr.mxu0 0.0
  %812 = vmatpush1.msra.mxu0 0.0
  %813 = vmatprep.subr.mxu0 0.0
  %814 = vmatpush1.msra.mxu0 0.0
  %815 = vmatprep.subr.mxu0 0.0
  %816 = vmatpush1.msra.mxu0 0.0
  %817 = vmatprep.subr.mxu0 0.0
  %818 = vmatpush1.msra.mxu0 0.0
  %819 = vmatprep.subr.mxu0 0.0
  %820 = vmatpush1.msra.mxu0 0.0
  %821 = vmatprep.subr.mxu0 0.0
  %822 = vmatpush1.msra.mxu0 0.0
  %823 = vmatprep.subr.mxu0 0.0
  %824 = vmatpush1.msra.mxu0 0.0
  %825 = vmatprep.subr.mxu0 0.0
  %826 = vmatpush1.msra.mxu0 0.0
  %827 = vmatprep.subr.mxu0 0.0
  %828 = vmatpush1.msra.mxu0 0.0
  %829 = vmatprep.subr.mxu0 0.0
  %830 = vmatpush1.msra.mxu0 0.0
  %831 = vmatprep.subr.mxu0 0.0
  %832 = vmatpush1.msra.mxu0 0.0
  %833 = vmatprep.subr.mxu0 0.0
  %834 = vmatpush1.msra.mxu0 0.0
  %835 = vmatprep.subr.mxu0 0.0
  %836 = vmatpush1.msra.mxu0 0.0
  %837 = vmatprep.subr.mxu0 0.0
  %838 = vmatpush1.msra.mxu0 0.0
  %839 = vmatprep.subr.mxu0 0.0
  %840 = vmatpush1.msra.mxu0 0.0
  %841 = vmatprep.subr.mxu0 0.0
  %842 = vmatpush1.msra.mxu0 0.0
  %843 = vmatprep.subr.mxu0 0.0
  %844 = vmatpush1.msra.mxu0 0.0
  %845 = vmatprep.subr.mxu0 0.0
  %846 = vmatpush1.msra.mxu0 0.0
  %847 = vmatprep.subr.mxu0 0.0
  %848 = vmatpush1.msra.mxu0 0.0
  %849 = vmatprep.subr.mxu0 0.0
  %850 = vmatpush1.msra.mxu0 0.0
  %851 = vmatprep.subr.mxu0 0.0
  %852 = vmatpush1.msra.mxu0 0.0
  %853 = vmatprep.subr.mxu0 0.0
  %854 = vmatpush1.msra.mxu0 0.0
  %855 = vmatprep.subr.mxu0 0.0
  %856 = vmatpush1.msra.mxu0 0.0
  %857 = vmatprep.subr.mxu0 0.0
  %858 = vmatpush1.msra.mxu0 0.0
  %859 = vmatprep.subr.mxu0 0.0
  %860 = vmatpush1.msra.mxu0 0.0
  %861 = vmatprep.subr.mxu0 0.0
  %862 = vmatpush1.msra.mxu0 0.0
  %863 = vmatprep.mubr.f32.mxu0 0.0
  %864 = vmatmul.mubr.f32.gmra.mrb[0].mxu0 %v797
  %v865 = vpop.f32.mrb[0].mxu0
  %v866 = vadd.f32 0.0, %v865
  %v867 = vpop.f32.mrb[0].mxu0
  %868 = vdwg.mxu0
  %v869 = vadd.f32 %v171, %v866
  %v870 = vxor.u32 %v869, 2147483648
  %v871 = vmul.f32 %v870, 1.442695
  %v872 = vpow.pop %v871
  %v873 = vadd.f32 %v872, 1.0
  %v874 = vrcp.pop %v873
  %v875 = vmul.f32 1.0, %v874
  %v876 = vtanh.pop %v869
  %v877 = vmul.f32 %v875, %v785
  %879 = vrot.lane.b32.xlu0 %v876, 64
  %v880 = vpop.permute.xlu0 %879
  %v882 = vmul.f32 %v875, %v880
  %884 = vrot.lane.b32.xlu0 %v882, 32
  %v885 = vpop.permute.xlu0 %884
  %v887 = vadd.f32 %v877, %v885
  %v888 = vtanh.pop %v887
  %890 = vrot.lane.b32.xlu0 %v888, 64
  %v891 = vpop.permute.xlu0 %890
  %v893 = vmul.f32 %v875, %v891
  %895 = vrot.lane.b32.xlu0 %v893, 32
  %v896 = vpop.permute.xlu0 %895
  %898 = vst.msk [vmem:[#allocation2 + $0x30] sm:$0xff] %vm183, %v896
  %v899 = vsel %vm183, %v896, 0
  %901 = vmatprep.subr.mxu0 0.0
  %902 = vmatpush1.msra.mxu0 %v179
  %903 = vmatprep.subr.mxu0 0.0
  %904 = vmatpush1.msra.mxu0 %v180
  %905 = vmatprep.subr.mxu0 0.0
  %906 = vmatpush1.msra.mxu0 %v181
  %907 = vmatprep.subr.mxu0 0.0
  %908 = vmatpush1.msra.mxu0 %v182
  %909 = vmatprep.subr.mxu0 0.0
  %910 = vmatpush1.msra.mxu0 0.0
  %911 = vmatprep.subr.mxu0 0.0
  %912 = vmatpush1.msra.mxu0 0.0
  %913 = vmatprep.subr.mxu0 0.0
  %914 = vmatpush1.msra.mxu0 0.0
  %915 = vmatprep.subr.mxu0 0.0
  %916 = vmatpush1.msra.mxu0 0.0
  %917 = vmatprep.subr.mxu0 0.0
  %918 = vmatpush1.msra.mxu0 0.0
  %919 = vmatprep.subr.mxu0 0.0
  %920 = vmatpush1.msra.mxu0 0.0
  %921 = vmatprep.subr.mxu0 0.0
  %922 = vmatpush1.msra.mxu0 0.0
  %923 = vmatprep.subr.mxu0 0.0
  %924 = vmatpush1.msra.mxu0 0.0
  %925 = vmatprep.subr.mxu0 0.0
  %926 = vmatpush1.msra.mxu0 0.0
  %927 = vmatprep.subr.mxu0 0.0
  %928 = vmatpush1.msra.mxu0 0.0
  %929 = vmatprep.subr.mxu0 0.0
  %930 = vmatpush1.msra.mxu0 0.0
  %931 = vmatprep.subr.mxu0 0.0
  %932 = vmatpush1.msra.mxu0 0.0
  %933 = vmatprep.subr.mxu0 0.0
  %934 = vmatpush1.msra.mxu0 0.0
  %935 = vmatprep.subr.mxu0 0.0
  %936 = vmatpush1.msra.mxu0 0.0
  %937 = vmatprep.subr.mxu0 0.0
  %938 = vmatpush1.msra.mxu0 0.0
  %939 = vmatprep.subr.mxu0 0.0
  %940 = vmatpush1.msra.mxu0 0.0
  %941 = vmatprep.subr.mxu0 0.0
  %942 = vmatpush1.msra.mxu0 0.0
  %943 = vmatprep.subr.mxu0 0.0
  %944 = vmatpush1.msra.mxu0 0.0
  %945 = vmatprep.subr.mxu0 0.0
  %946 = vmatpush1.msra.mxu0 0.0
  %947 = vmatprep.subr.mxu0 0.0
  %948 = vmatpush1.msra.mxu0 0.0
  %949 = vmatprep.subr.mxu0 0.0
  %950 = vmatpush1.msra.mxu0 0.0
  %951 = vmatprep.subr.mxu0 0.0
  %952 = vmatpush1.msra.mxu0 0.0
  %953 = vmatprep.subr.mxu0 0.0
  %954 = vmatpush1.msra.mxu0 0.0
  %955 = vmatprep.subr.mxu0 0.0
  %956 = vmatpush1.msra.mxu0 0.0
  %957 = vmatprep.subr.mxu0 0.0
  %958 = vmatpush1.msra.mxu0 0.0
  %959 = vmatprep.subr.mxu0 0.0
  %960 = vmatpush1.msra.mxu0 0.0
  %961 = vmatprep.subr.mxu0 0.0
  %962 = vmatpush1.msra.mxu0 0.0
  %963 = vmatprep.subr.mxu0 0.0
  %964 = vmatpush1.msra.mxu0 0.0
  %965 = vmatprep.mubr.f32.mxu0 0.0
  %966 = vmatmul.mubr.f32.gmra.mrb[0].mxu0 %v899
  %v967 = vpop.f32.mrb[0].mxu0
  %v968 = vadd.f32 0.0, %v967
  %v969 = vpop.f32.mrb[0].mxu0
  %970 = vdwg.mxu0
  %v971 = vadd.f32 %v176, %v968
  %v972 = vxor.u32 %v971, 2147483648
  %v973 = vmul.f32 %v972, 1.442695
  %v974 = vpow.pop %v973
  %v975 = vadd.f32 %v974, 1.0
  %v976 = vrcp.pop %v975
  %v977 = vmul.f32 1.0, %v976
  %v978 = vtanh.pop %v971
  %v979 = vmul.f32 %v977, %v887
  %981 = vrot.lane.b32.xlu0 %v978, 64
  %v982 = vpop.permute.xlu0 %981
  %v984 = vmul.f32 %v977, %v982
  %986 = vrot.lane.b32.xlu0 %v984, 32
  %v987 = vpop.permute.xlu0 %986
  %v989 = vadd.f32 %v979, %v987
  %v990 = vtanh.pop %v989
  %992 = vrot.lane.b32.xlu0 %v990, 64
  %v993 = vpop.permute.xlu0 %992
  %v995 = vmul.f32 %v977, %v993
  %997 = vrot.lane.b32.xlu0 %v995, 32
  %v998 = vpop.permute.xlu0 %997
  %1000 = vst.msk [vmem:[#allocation2 + $0x38] sm:$0xff] %vm183, %v998
  %v1001 = vld [vmem:[#allocation2] sm:$0xff]
  %v1002 = vld [vmem:[#allocation2 + $0x8] sm:$0xff]
  %v1003 = vld [vmem:[#allocation2 + $0x10] sm:$0xff]
  %v1004 = vld [vmem:[#allocation2 + $0x18] sm:$0xff]
  %v1005 = vld [vmem:[#allocation2 + $0x20] sm:$0xff]
  %v1006 = vld [vmem:[#allocation2 + $0x28] sm:$0xff]
  %v1007 = vld [vmem:[#allocation2 + $0x30] sm:$0xff]
  %v1008 = vld [vmem:[#allocation2 + $0x38] sm:$0xff]
  %v1009 = vld [vmem:[%s4] sm:$0xff]
  %v1010 = vld [vmem:[%s4 + $0x8] sm:$0xff]
  %v1011 = vld [vmem:[%s4 + $0x10] sm:$0xff]
  %v1012 = vld [vmem:[%s4 + $0x18] sm:$0xff]
  %v1013 = vld [vmem:[%s6] sm:$0x1]
  %v1015 = vlaneseq
  %v1016 = vshrl.u32 %v1015, 7
  %v1017 = vsub.s32 0, %v1016
  %v1018 = vrot.slane %v1013, %v1017
  %v1021 = vsel %vm183, %v1001, 0
  %v1024 = vsel %vm183, %v1002, 0
  %v1027 = vsel %vm183, %v1003, 0
  %v1030 = vsel %vm183, %v1004, 0
  %v1033 = vsel %vm183, %v1005, 0
  %v1036 = vsel %vm183, %v1006, 0
  %v1039 = vsel %vm183, %v1007, 0
  %v1042 = vsel %vm183, %v1008, 0
  %1044 = vmatprep.subr.mxu0 0.0
  %1045 = vmatpush1.msra.mxu0 %v1009
  %1046 = vmatprep.subr.mxu0 0.0
  %1047 = vmatpush1.msra.mxu0 %v1010
  %1048 = vmatprep.subr.mxu0 0.0
  %1049 = vmatpush1.msra.mxu0 %v1011
  %1050 = vmatprep.subr.mxu0 0.0
  %1051 = vmatpush1.msra.mxu0 %v1012
  %1052 = vmatprep.subr.mxu0 0.0
  %1053 = vmatpush1.msra.mxu0 0.0
  %1054 = vmatprep.subr.mxu0 0.0
  %1055 = vmatpush1.msra.mxu0 0.0
  %1056 = vmatprep.subr.mxu0 0.0
  %1057 = vmatpush1.msra.mxu0 0.0
  %1058 = vmatprep.subr.mxu0 0.0
  %1059 = vmatpush1.msra.mxu0 0.0
  %1060 = vmatprep.subr.mxu0 0.0
  %1061 = vmatpush1.msra.mxu0 0.0
  %1062 = vmatprep.subr.mxu0 0.0
  %1063 = vmatpush1.msra.mxu0 0.0
  %1064 = vmatprep.subr.mxu0 0.0
  %1065 = vmatpush1.msra.mxu0 0.0
  %1066 = vmatprep.subr.mxu0 0.0
  %1067 = vmatpush1.msra.mxu0 0.0
  %1068 = vmatprep.subr.mxu0 0.0
  %1069 = vmatpush1.msra.mxu0 0.0
  %1070 = vmatprep.subr.mxu0 0.0
  %1071 = vmatpush1.msra.mxu0 0.0
  %1072 = vmatprep.subr.mxu0 0.0
  %1073 = vmatpush1.msra.mxu0 0.0
  %1074 = vmatprep.subr.mxu0 0.0
  %1075 = vmatpush1.msra.mxu0 0.0
  %1076 = vmatprep.subr.mxu0 0.0
  %1077 = vmatpush1.msra.mxu0 0.0
  %1078 = vmatprep.subr.mxu0 0.0
  %1079 = vmatpush1.msra.mxu0 0.0
  %1080 = vmatprep.subr.mxu0 0.0
  %1081 = vmatpush1.msra.mxu0 0.0
  %1082 = vmatprep.subr.mxu0 0.0
  %1083 = vmatpush1.msra.mxu0 0.0
  %1084 = vmatprep.subr.mxu0 0.0
  %1085 = vmatpush1.msra.mxu0 0.0
  %1086 = vmatprep.subr.mxu0 0.0
  %1087 = vmatpush1.msra.mxu0 0.0
  %1088 = vmatprep.subr.mxu0 0.0
  %1089 = vmatpush1.msra.mxu0 0.0
  %1090 = vmatprep.subr.mxu0 0.0
  %1091 = vmatpush1.msra.mxu0 0.0
  %1092 = vmatprep.subr.mxu0 0.0
  %1093 = vmatpush1.msra.mxu0 0.0
  %1094 = vmatprep.subr.mxu0 0.0
  %1095 = vmatpush1.msra.mxu0 0.0
  %1096 = vmatprep.subr.mxu0 0.0
  %1097 = vmatpush1.msra.mxu0 0.0
  %1098 = vmatprep.subr.mxu0 0.0
  %1099 = vmatpush1.msra.mxu0 0.0
  %1100 = vmatprep.subr.mxu0 0.0
  %1101 = vmatpush1.msra.mxu0 0.0
  %1102 = vmatprep.subr.mxu0 0.0
  %1103 = vmatpush1.msra.mxu0 0.0
  %1104 = vmatprep.subr.mxu0 0.0
  %1105 = vmatpush1.msra.mxu0 0.0
  %1106 = vmatprep.subr.mxu0 0.0
  %1107 = vmatpush1.msra.mxu0 0.0
  %1108 = vmatprep.mubr.f32.mxu0 0.0
  %1109 = vmatmul.mubr.f32.gmra.mrb[0].mxu0 %v1021
  %v1110 = vpop.f32.mrb[0].mxu0
  %v1111 = vadd.f32 %v1018, %v1110
  %v1112 = vpop.f32.mrb[0].mxu0
  %1113 = vmatprep.mubr.f32.mxu0 0.0
  %1114 = vmatmul.mubr.f32.gmra.mrb[0].mxu0 %v1024
  %v1115 = vpop.f32.mrb[0].mxu0
  %v1116 = vadd.f32 %v1018, %v1115
  %v1117 = vpop.f32.mrb[0].mxu0
  %1118 = vmatprep.mubr.f32.mxu0 0.0
  %1119 = vmatmul.mubr.f32.gmra.mrb[0].mxu0 %v1027
  %v1120 = vpop.f32.mrb[0].mxu0
  %v1121 = vadd.f32 %v1018, %v1120
  %v1122 = vpop.f32.mrb[0].mxu0
  %1123 = vmatprep.mubr.f32.mxu0 0.0
  %1124 = vmatmul.mubr.f32.gmra.mrb[0].mxu0 %v1030
  %v1125 = vpop.f32.mrb[0].mxu0
  %v1126 = vadd.f32 %v1018, %v1125
  %v1127 = vpop.f32.mrb[0].mxu0
  %1128 = vmatprep.mubr.f32.mxu0 0.0
  %1129 = vmatmul.mubr.f32.gmra.mrb[0].mxu0 %v1033
  %v1130 = vpop.f32.mrb[0].mxu0
  %v1131 = vadd.f32 %v1018, %v1130
  %v1132 = vpop.f32.mrb[0].mxu0
  %1133 = vmatprep.mubr.f32.mxu0 0.0
  %1134 = vmatmul.mubr.f32.gmra.mrb[0].mxu0 %v1036
  %v1135 = vpop.f32.mrb[0].mxu0
  %v1136 = vadd.f32 %v1018, %v1135
  %v1137 = vpop.f32.mrb[0].mxu0
  %1138 = vmatprep.mubr.f32.mxu0 0.0
  %1139 = vmatmul.mubr.f32.gmra.mrb[0].mxu0 %v1039
  %v1140 = vpop.f32.mrb[0].mxu0
  %v1141 = vadd.f32 %v1018, %v1140
  %v1142 = vpop.f32.mrb[0].mxu0
  %1143 = vmatprep.mubr.f32.mxu0 0.0
  %1144 = vmatmul.mubr.f32.gmra.mrb[0].mxu0 %v1042
  %v1145 = vpop.f32.mrb[0].mxu0
  %v1146 = vadd.f32 %v1018, %v1145
  %v1147 = vpop.f32.mrb[0].mxu0
  %1148 = vdwg.mxu0
  %v1149 = vld [vmem:[%s5] sm:$0xff]
  %v1150 = vld [vmem:[%s5 + $0x8] sm:$0xff]
  %v1151 = vld [vmem:[%s5 + $0x10] sm:$0xff]
  %v1152 = vld [vmem:[%s5 + $0x18] sm:$0xff]
  %1153 = vmatprep.subr.mxu0 0.0
  %1154 = vmatpush1.msra.mxu0 %v1149
  %1155 = vmatprep.subr.mxu0 0.0
  %1156 = vmatpush1.msra.mxu0 %v1150
  %1157 = vmatprep.subr.mxu0 0.0
  %1158 = vmatpush1.msra.mxu0 %v1151
  %1159 = vmatprep.subr.mxu0 0.0
  %1160 = vmatpush1.msra.mxu0 %v1152
  %1161 = vmatprep.subr.mxu0 0.0
  %1162 = vmatpush1.msra.mxu0 0.0
  %1163 = vmatprep.subr.mxu0 0.0
  %1164 = vmatpush1.msra.mxu0 0.0
  %1165 = vmatprep.subr.mxu0 0.0
  %1166 = vmatpush1.msra.mxu0 0.0
  %1167 = vmatprep.subr.mxu0 0.0
  %1168 = vmatpush1.msra.mxu0 0.0
  %1169 = vmatprep.subr.mxu0 0.0
  %1170 = vmatpush1.msra.mxu0 0.0
  %1171 = vmatprep.subr.mxu0 0.0
  %1172 = vmatpush1.msra.mxu0 0.0
  %1173 = vmatprep.subr.mxu0 0.0
  %1174 = vmatpush1.msra.mxu0 0.0
  %1175 = vmatprep.subr.mxu0 0.0
  %1176 = vmatpush1.msra.mxu0 0.0
  %1177 = vmatprep.subr.mxu0 0.0
  %1178 = vmatpush1.msra.mxu0 0.0
  %1179 = vmatprep.subr.mxu0 0.0
  %1180 = vmatpush1.msra.mxu0 0.0
  %1181 = vmatprep.subr.mxu0 0.0
  %1182 = vmatpush1.msra.mxu0 0.0
  %1183 = vmatprep.subr.mxu0 0.0
  %1184 = vmatpush1.msra.mxu0 0.0
  %1185 = vmatprep.subr.mxu0 0.0
  %1186 = vmatpush1.msra.mxu0 0.0
  %1187 = vmatprep.subr.mxu0 0.0
  %1188 = vmatpush1.msra.mxu0 0.0
  %1189 = vmatprep.subr.mxu0 0.0
  %1190 = vmatpush1.msra.mxu0 0.0
  %1191 = vmatprep.subr.mxu0 0.0
  %1192 = vmatpush1.msra.mxu0 0.0
  %1193 = vmatprep.subr.mxu0 0.0
  %1194 = vmatpush1.msra.mxu0 0.0
  %1195 = vmatprep.subr.mxu0 0.0
  %1196 = vmatpush1.msra.mxu0 0.0
  %1197 = vmatprep.subr.mxu0 0.0
  %1198 = vmatpush1.msra.mxu0 0.0
  %1199 = vmatprep.subr.mxu0 0.0
  %1200 = vmatpush1.msra.mxu0 0.0
  %1201 = vmatprep.subr.mxu0 0.0
  %1202 = vmatpush1.msra.mxu0 0.0
  %1203 = vmatprep.subr.mxu0 0.0
  %1204 = vmatpush1.msra.mxu0 0.0
  %1205 = vmatprep.subr.mxu0 0.0
  %1206 = vmatpush1.msra.mxu0 0.0
  %1207 = vmatprep.subr.mxu0 0.0
  %1208 = vmatpush1.msra.mxu0 0.0
  %1209 = vmatprep.subr.mxu0 0.0
  %1210 = vmatpush1.msra.mxu0 0.0
  %1211 = vmatprep.subr.mxu0 0.0
  %1212 = vmatpush1.msra.mxu0 0.0
  %1213 = vmatprep.subr.mxu0 0.0
  %1214 = vmatpush1.msra.mxu0 0.0
  %1215 = vmatprep.subr.mxu0 0.0
  %1216 = vmatpush1.msra.mxu0 0.0
  %1217 = vmatprep.mubr.f32.mxu0 0.0
  %1218 = vmatmul.mubr.f32.gmra.mrb[0].mxu0 %v185
  %v1219 = vpop.f32.mrb[0].mxu0
  %v1220 = vadd.f32 0.0, %v1219
  %v1221 = vpop.f32.mrb[0].mxu0
  %1222 = vdwg.mxu0
  %v1223 = vadd.f32 %v1111, %v1220
  %v1224 = vxor.u32 %v1223, 2147483648
  %v1225 = vmul.f32 %v1224, 1.442695
  %v1226 = vpow.pop %v1225
  %v1227 = vadd.f32 %v1226, 1.0
  %v1228 = vrcp.pop %v1227
  %v1229 = vmul.f32 1.0, %v1228
  %v1230 = vtanh.pop %v1223
  %v1231 = vmul.f32 %v1229, 0.0
  %1233 = vrot.lane.b32.xlu0 %v1230, 64
  %v1234 = vpop.permute.xlu0 %1233
  %v1236 = vmul.f32 %v1229, %v1234
  %1238 = vrot.lane.b32.xlu0 %v1236, 32
  %v1239 = vpop.permute.xlu0 %1238
  %v1241 = vadd.f32 %v1231, %v1239
  %v1242 = vtanh.pop %v1241
  %1244 = vrot.lane.b32.xlu0 %v1242, 64
  %v1245 = vpop.permute.xlu0 %1244
  %v1247 = vmul.f32 %v1229, %v1245
  %1249 = vrot.lane.b32.xlu0 %v1247, 32
  %v1250 = vpop.permute.xlu0 %1249
  %v1251 = vsel %vm183, %v1250, 0
  %1253 = vmatprep.subr.mxu0 0.0
  %1254 = vmatpush1.msra.mxu0 %v1149
  %1255 = vmatprep.subr.mxu0 0.0
  %1256 = vmatpush1.msra.mxu0 %v1150
  %1257 = vmatprep.subr.mxu0 0.0
  %1258 = vmatpush1.msra.mxu0 %v1151
  %1259 = vmatprep.subr.mxu0 0.0
  %1260 = vmatpush1.msra.mxu0 %v1152
  %1261 = vmatprep.subr.mxu0 0.0
  %1262 = vmatpush1.msra.mxu0 0.0
  %1263 = vmatprep.subr.mxu0 0.0
  %1264 = vmatpush1.msra.mxu0 0.0
  %1265 = vmatprep.subr.mxu0 0.0
  %1266 = vmatpush1.msra.mxu0 0.0
  %1267 = vmatprep.subr.mxu0 0.0
  %1268 = vmatpush1.msra.mxu0 0.0
  %1269 = vmatprep.subr.mxu0 0.0
  %1270 = vmatpush1.msra.mxu0 0.0
  %1271 = vmatprep.subr.mxu0 0.0
  %1272 = vmatpush1.msra.mxu0 0.0
  %1273 = vmatprep.subr.mxu0 0.0
  %1274 = vmatpush1.msra.mxu0 0.0
  %1275 = vmatprep.subr.mxu0 0.0
  %1276 = vmatpush1.msra.mxu0 0.0
  %1277 = vmatprep.subr.mxu0 0.0
  %1278 = vmatpush1.msra.mxu0 0.0
  %1279 = vmatprep.subr.mxu0 0.0
  %1280 = vmatpush1.msra.mxu0 0.0
  %1281 = vmatprep.subr.mxu0 0.0
  %1282 = vmatpush1.msra.mxu0 0.0
  %1283 = vmatprep.subr.mxu0 0.0
  %1284 = vmatpush1.msra.mxu0 0.0
  %1285 = vmatprep.subr.mxu0 0.0
  %1286 = vmatpush1.msra.mxu0 0.0
  %1287 = vmatprep.subr.mxu0 0.0
  %1288 = vmatpush1.msra.mxu0 0.0
  %1289 = vmatprep.subr.mxu0 0.0
  %1290 = vmatpush1.msra.mxu0 0.0
  %1291 = vmatprep.subr.mxu0 0.0
  %1292 = vmatpush1.msra.mxu0 0.0
  %1293 = vmatprep.subr.mxu0 0.0
  %1294 = vmatpush1.msra.mxu0 0.0
  %1295 = vmatprep.subr.mxu0 0.0
  %1296 = vmatpush1.msra.mxu0 0.0
  %1297 = vmatprep.subr.mxu0 0.0
  %1298 = vmatpush1.msra.mxu0 0.0
  %1299 = vmatprep.subr.mxu0 0.0
  %1300 = vmatpush1.msra.mxu0 0.0
  %1301 = vmatprep.subr.mxu0 0.0
  %1302 = vmatpush1.msra.mxu0 0.0
  %1303 = vmatprep.subr.mxu0 0.0
  %1304 = vmatpush1.msra.mxu0 0.0
  %1305 = vmatprep.subr.mxu0 0.0
  %1306 = vmatpush1.msra.mxu0 0.0
  %1307 = vmatprep.subr.mxu0 0.0
  %1308 = vmatpush1.msra.mxu0 0.0
  %1309 = vmatprep.subr.mxu0 0.0
  %1310 = vmatpush1.msra.mxu0 0.0
  %1311 = vmatprep.subr.mxu0 0.0
  %1312 = vmatpush1.msra.mxu0 0.0
  %1313 = vmatprep.subr.mxu0 0.0
  %1314 = vmatpush1.msra.mxu0 0.0
  %1315 = vmatprep.subr.mxu0 0.0
  %1316 = vmatpush1.msra.mxu0 0.0
  %1317 = vmatprep.mubr.f32.mxu0 0.0
  %1318 = vmatmul.mubr.f32.gmra.mrb[0].mxu0 %v1251
  %v1319 = vpop.f32.mrb[0].mxu0
  %v1320 = vadd.f32 0.0, %v1319
  %v1321 = vpop.f32.mrb[0].mxu0
  %1322 = vdwg.mxu0
  %v1323 = vadd.f32 %v1116, %v1320
  %v1324 = vxor.u32 %v1323, 2147483648
  %v1325 = vmul.f32 %v1324, 1.442695
  %v1326 = vpow.pop %v1325
  %v1327 = vadd.f32 %v1326, 1.0
  %v1328 = vrcp.pop %v1327
  %v1329 = vmul.f32 1.0, %v1328
  %v1330 = vtanh.pop %v1323
  %v1331 = vmul.f32 %v1329, %v1241
  %1333 = vrot.lane.b32.xlu0 %v1330, 64
  %v1334 = vpop.permute.xlu0 %1333
  %v1336 = vmul.f32 %v1329, %v1334
  %1338 = vrot.lane.b32.xlu0 %v1336, 32
  %v1339 = vpop.permute.xlu0 %1338
  %v1341 = vadd.f32 %v1331, %v1339
  %v1342 = vtanh.pop %v1341
  %1344 = vrot.lane.b32.xlu0 %v1342, 64
  %v1345 = vpop.permute.xlu0 %1344
  %v1347 = vmul.f32 %v1329, %v1345
  %1349 = vrot.lane.b32.xlu0 %v1347, 32
  %v1350 = vpop.permute.xlu0 %1349
  %v1351 = vsel %vm183, %v1350, 0
  %1353 = vmatprep.subr.mxu0 0.0
  %1354 = vmatpush1.msra.mxu0 %v1149
  %1355 = vmatprep.subr.mxu0 0.0
  %1356 = vmatpush1.msra.mxu0 %v1150
  %1357 = vmatprep.subr.mxu0 0.0
  %1358 = vmatpush1.msra.mxu0 %v1151
  %1359 = vmatprep.subr.mxu0 0.0
  %1360 = vmatpush1.msra.mxu0 %v1152
  %1361 = vmatprep.subr.mxu0 0.0
  %1362 = vmatpush1.msra.mxu0 0.0
  %1363 = vmatprep.subr.mxu0 0.0
  %1364 = vmatpush1.msra.mxu0 0.0
  %1365 = vmatprep.subr.mxu0 0.0
  %1366 = vmatpush1.msra.mxu0 0.0
  %1367 = vmatprep.subr.mxu0 0.0
  %1368 = vmatpush1.msra.mxu0 0.0
  %1369 = vmatprep.subr.mxu0 0.0
  %1370 = vmatpush1.msra.mxu0 0.0
  %1371 = vmatprep.subr.mxu0 0.0
  %1372 = vmatpush1.msra.mxu0 0.0
  %1373 = vmatprep.subr.mxu0 0.0
  %1374 = vmatpush1.msra.mxu0 0.0
  %1375 = vmatprep.subr.mxu0 0.0
  %1376 = vmatpush1.msra.mxu0 0.0
  %1377 = vmatprep.subr.mxu0 0.0
  %1378 = vmatpush1.msra.mxu0 0.0
  %1379 = vmatprep.subr.mxu0 0.0
  %1380 = vmatpush1.msra.mxu0 0.0
  %1381 = vmatprep.subr.mxu0 0.0
  %1382 = vmatpush1.msra.mxu0 0.0
  %1383 = vmatprep.subr.mxu0 0.0
  %1384 = vmatpush1.msra.mxu0 0.0
  %1385 = vmatprep.subr.mxu0 0.0
  %1386 = vmatpush1.msra.mxu0 0.0
  %1387 = vmatprep.subr.mxu0 0.0
  %1388 = vmatpush1.msra.mxu0 0.0
  %1389 = vmatprep.subr.mxu0 0.0
  %1390 = vmatpush1.msra.mxu0 0.0
  %1391 = vmatprep.subr.mxu0 0.0
  %1392 = vmatpush1.msra.mxu0 0.0
  %1393 = vmatprep.subr.mxu0 0.0
  %1394 = vmatpush1.msra.mxu0 0.0
  %1395 = vmatprep.subr.mxu0 0.0
  %1396 = vmatpush1.msra.mxu0 0.0
  %1397 = vmatprep.subr.mxu0 0.0
  %1398 = vmatpush1.msra.mxu0 0.0
  %1399 = vmatprep.subr.mxu0 0.0
  %1400 = vmatpush1.msra.mxu0 0.0
  %1401 = vmatprep.subr.mxu0 0.0
  %1402 = vmatpush1.msra.mxu0 0.0
  %1403 = vmatprep.subr.mxu0 0.0
  %1404 = vmatpush1.msra.mxu0 0.0
  %1405 = vmatprep.subr.mxu0 0.0
  %1406 = vmatpush1.msra.mxu0 0.0
  %1407 = vmatprep.subr.mxu0 0.0
  %1408 = vmatpush1.msra.mxu0 0.0
  %1409 = vmatprep.subr.mxu0 0.0
  %1410 = vmatpush1.msra.mxu0 0.0
  %1411 = vmatprep.subr.mxu0 0.0
  %1412 = vmatpush1.msra.mxu0 0.0
  %1413 = vmatprep.subr.mxu0 0.0
  %1414 = vmatpush1.msra.mxu0 0.0
  %1415 = vmatprep.subr.mxu0 0.0
  %1416 = vmatpush1.msra.mxu0 0.0
  %1417 = vmatprep.mubr.f32.mxu0 0.0
  %1418 = vmatmul.mubr.f32.gmra.mrb[0].mxu0 %v1351
  %v1419 = vpop.f32.mrb[0].mxu0
  %v1420 = vadd.f32 0.0, %v1419
  %v1421 = vpop.f32.mrb[0].mxu0
  %1422 = vdwg.mxu0
  %v1423 = vadd.f32 %v1121, %v1420
  %v1424 = vxor.u32 %v1423, 2147483648
  %v1425 = vmul.f32 %v1424, 1.442695
  %v1426 = vpow.pop %v1425
  %v1427 = vadd.f32 %v1426, 1.0
  %v1428 = vrcp.pop %v1427
  %v1429 = vmul.f32 1.0, %v1428
  %v1430 = vtanh.pop %v1423
  %v1431 = vmul.f32 %v1429, %v1341
  %1433 = vrot.lane.b32.xlu0 %v1430, 64
  %v1434 = vpop.permute.xlu0 %1433
  %v1436 = vmul.f32 %v1429, %v1434
  %1438 = vrot.lane.b32.xlu0 %v1436, 32
  %v1439 = vpop.permute.xlu0 %1438
  %v1441 = vadd.f32 %v1431, %v1439
  %v1442 = vtanh.pop %v1441
  %1444 = vrot.lane.b32.xlu0 %v1442, 64
  %v1445 = vpop.permute.xlu0 %1444
  %v1447 = vmul.f32 %v1429, %v1445
  %1449 = vrot.lane.b32.xlu0 %v1447, 32
  %v1450 = vpop.permute.xlu0 %1449
  %v1451 = vsel %vm183, %v1450, 0
  %1453 = vmatprep.subr.mxu0 0.0
  %1454 = vmatpush1.msra.mxu0 %v1149
  %1455 = vmatprep.subr.mxu0 0.0
  %1456 = vmatpush1.msra.mxu0 %v1150
  %1457 = vmatprep.subr.mxu0 0.0
  %1458 = vmatpush1.msra.mxu0 %v1151
  %1459 = vmatprep.subr.mxu0 0.0
  %1460 = vmatpush1.msra.mxu0 %v1152
  %1461 = vmatprep.subr.mxu0 0.0
  %1462 = vmatpush1.msra.mxu0 0.0
  %1463 = vmatprep.subr.mxu0 0.0
  %1464 = vmatpush1.msra.mxu0 0.0
  %1465 = vmatprep.subr.mxu0 0.0
  %1466 = vmatpush1.msra.mxu0 0.0
  %1467 = vmatprep.subr.mxu0 0.0
  %1468 = vmatpush1.msra.mxu0 0.0
  %1469 = vmatprep.subr.mxu0 0.0
  %1470 = vmatpush1.msra.mxu0 0.0
  %1471 = vmatprep.subr.mxu0 0.0
  %1472 = vmatpush1.msra.mxu0 0.0
  %1473 = vmatprep.subr.mxu0 0.0
  %1474 = vmatpush1.msra.mxu0 0.0
  %1475 = vmatprep.subr.mxu0 0.0
  %1476 = vmatpush1.msra.mxu0 0.0
  %1477 = vmatprep.subr.mxu0 0.0
  %1478 = vmatpush1.msra.mxu0 0.0
  %1479 = vmatprep.subr.mxu0 0.0
  %1480 = vmatpush1.msra.mxu0 0.0
  %1481 = vmatprep.subr.mxu0 0.0
  %1482 = vmatpush1.msra.mxu0 0.0
  %1483 = vmatprep.subr.mxu0 0.0
  %1484 = vmatpush1.msra.mxu0 0.0
  %1485 = vmatprep.subr.mxu0 0.0
  %1486 = vmatpush1.msra.mxu0 0.0
  %1487 = vmatprep.subr.mxu0 0.0
  %1488 = vmatpush1.msra.mxu0 0.0
  %1489 = vmatprep.subr.mxu0 0.0
  %1490 = vmatpush1.msra.mxu0 0.0
  %1491 = vmatprep.subr.mxu0 0.0
  %1492 = vmatpush1.msra.mxu0 0.0
  %1493 = vmatprep.subr.mxu0 0.0
  %1494 = vmatpush1.msra.mxu0 0.0
  %1495 = vmatprep.subr.mxu0 0.0
  %1496 = vmatpush1.msra.mxu0 0.0
  %1497 = vmatprep.subr.mxu0 0.0
  %1498 = vmatpush1.msra.mxu0 0.0
  %1499 = vmatprep.subr.mxu0 0.0
  %1500 = vmatpush1.msra.mxu0 0.0
  %1501 = vmatprep.subr.mxu0 0.0
  %1502 = vmatpush1.msra.mxu0 0.0
  %1503 = vmatprep.subr.mxu0 0.0
  %1504 = vmatpush1.msra.mxu0 0.0
  %1505 = vmatprep.subr.mxu0 0.0
  %1506 = vmatpush1.msra.mxu0 0.0
  %1507 = vmatprep.subr.mxu0 0.0
  %1508 = vmatpush1.msra.mxu0 0.0
  %1509 = vmatprep.subr.mxu0 0.0
  %1510 = vmatpush1.msra.mxu0 0.0
  %1511 = vmatprep.subr.mxu0 0.0
  %1512 = vmatpush1.msra.mxu0 0.0
  %1513 = vmatprep.subr.mxu0 0.0
  %1514 = vmatpush1.msra.mxu0 0.0
  %1515 = vmatprep.subr.mxu0 0.0
  %1516 = vmatpush1.msra.mxu0 0.0
  %1517 = vmatprep.mubr.f32.mxu0 0.0
  %1518 = vmatmul.mubr.f32.gmra.mrb[0].mxu0 %v1451
  %v1519 = vpop.f32.mrb[0].mxu0
  %v1520 = vadd.f32 0.0, %v1519
  %v1521 = vpop.f32.mrb[0].mxu0
  %1522 = vdwg.mxu0
  %v1523 = vadd.f32 %v1126, %v1520
  %v1524 = vxor.u32 %v1523, 2147483648
  %v1525 = vmul.f32 %v1524, 1.442695
  %v1526 = vpow.pop %v1525
  %v1527 = vadd.f32 %v1526, 1.0
  %v1528 = vrcp.pop %v1527
  %v1529 = vmul.f32 1.0, %v1528
  %v1530 = vtanh.pop %v1523
  %v1531 = vmul.f32 %v1529, %v1441
  %1533 = vrot.lane.b32.xlu0 %v1530, 64
  %v1534 = vpop.permute.xlu0 %1533
  %v1536 = vmul.f32 %v1529, %v1534
  %1538 = vrot.lane.b32.xlu0 %v1536, 32
  %v1539 = vpop.permute.xlu0 %1538
  %v1541 = vadd.f32 %v1531, %v1539
  %v1542 = vtanh.pop %v1541
  %1544 = vrot.lane.b32.xlu0 %v1542, 64
  %v1545 = vpop.permute.xlu0 %1544
  %v1547 = vmul.f32 %v1529, %v1545
  %1549 = vrot.lane.b32.xlu0 %v1547, 32
  %v1550 = vpop.permute.xlu0 %1549
  %v1551 = vsel %vm183, %v1550, 0
  %1553 = vmatprep.subr.mxu0 0.0
  %1554 = vmatpush1.msra.mxu0 %v1149
  %1555 = vmatprep.subr.mxu0 0.0
  %1556 = vmatpush1.msra.mxu0 %v1150
  %1557 = vmatprep.subr.mxu0 0.0
  %1558 = vmatpush1.msra.mxu0 %v1151
  %1559 = vmatprep.subr.mxu0 0.0
  %1560 = vmatpush1.msra.mxu0 %v1152
  %1561 = vmatprep.subr.mxu0 0.0
  %1562 = vmatpush1.msra.mxu0 0.0
  %1563 = vmatprep.subr.mxu0 0.0
  %1564 = vmatpush1.msra.mxu0 0.0
  %1565 = vmatprep.subr.mxu0 0.0
  %1566 = vmatpush1.msra.mxu0 0.0
  %1567 = vmatprep.subr.mxu0 0.0
  %1568 = vmatpush1.msra.mxu0 0.0
  %1569 = vmatprep.subr.mxu0 0.0
  %1570 = vmatpush1.msra.mxu0 0.0
  %1571 = vmatprep.subr.mxu0 0.0
  %1572 = vmatpush1.msra.mxu0 0.0
  %1573 = vmatprep.subr.mxu0 0.0
  %1574 = vmatpush1.msra.mxu0 0.0
  %1575 = vmatprep.subr.mxu0 0.0
  %1576 = vmatpush1.msra.mxu0 0.0
  %1577 = vmatprep.subr.mxu0 0.0
  %1578 = vmatpush1.msra.mxu0 0.0
  %1579 = vmatprep.subr.mxu0 0.0
  %1580 = vmatpush1.msra.mxu0 0.0
  %1581 = vmatprep.subr.mxu0 0.0
  %1582 = vmatpush1.msra.mxu0 0.0
  %1583 = vmatprep.subr.mxu0 0.0
  %1584 = vmatpush1.msra.mxu0 0.0
  %1585 = vmatprep.subr.mxu0 0.0
  %1586 = vmatpush1.msra.mxu0 0.0
  %1587 = vmatprep.subr.mxu0 0.0
  %1588 = vmatpush1.msra.mxu0 0.0
  %1589 = vmatprep.subr.mxu0 0.0
  %1590 = vmatpush1.msra.mxu0 0.0
  %1591 = vmatprep.subr.mxu0 0.0
  %1592 = vmatpush1.msra.mxu0 0.0
  %1593 = vmatprep.subr.mxu0 0.0
  %1594 = vmatpush1.msra.mxu0 0.0
  %1595 = vmatprep.subr.mxu0 0.0
  %1596 = vmatpush1.msra.mxu0 0.0
  %1597 = vmatprep.subr.mxu0 0.0
  %1598 = vmatpush1.msra.mxu0 0.0
  %1599 = vmatprep.subr.mxu0 0.0
  %1600 = vmatpush1.msra.mxu0 0.0
  %1601 = vmatprep.subr.mxu0 0.0
  %1602 = vmatpush1.msra.mxu0 0.0
  %1603 = vmatprep.subr.mxu0 0.0
  %1604 = vmatpush1.msra.mxu0 0.0
  %1605 = vmatprep.subr.mxu0 0.0
  %1606 = vmatpush1.msra.mxu0 0.0
  %1607 = vmatprep.subr.mxu0 0.0
  %1608 = vmatpush1.msra.mxu0 0.0
  %1609 = vmatprep.subr.mxu0 0.0
  %1610 = vmatpush1.msra.mxu0 0.0
  %1611 = vmatprep.subr.mxu0 0.0
  %1612 = vmatpush1.msra.mxu0 0.0
  %1613 = vmatprep.subr.mxu0 0.0
  %1614 = vmatpush1.msra.mxu0 0.0
  %1615 = vmatprep.subr.mxu0 0.0
  %1616 = vmatpush1.msra.mxu0 0.0
  %1617 = vmatprep.mubr.f32.mxu0 0.0
  %1618 = vmatmul.mubr.f32.gmra.mrb[0].mxu0 %v1551
  %v1619 = vpop.f32.mrb[0].mxu0
  %v1620 = vadd.f32 0.0, %v1619
  %v1621 = vpop.f32.mrb[0].mxu0
  %1622 = vdwg.mxu0
  %v1623 = vadd.f32 %v1131, %v1620
  %v1624 = vxor.u32 %v1623, 2147483648
  %v1625 = vmul.f32 %v1624, 1.442695
  %v1626 = vpow.pop %v1625
  %v1627 = vadd.f32 %v1626, 1.0
  %v1628 = vrcp.pop %v1627
  %v1629 = vmul.f32 1.0, %v1628
  %v1630 = vtanh.pop %v1623
  %v1631 = vmul.f32 %v1629, %v1541
  %1633 = vrot.lane.b32.xlu0 %v1630, 64
  %v1634 = vpop.permute.xlu0 %1633
  %v1636 = vmul.f32 %v1629, %v1634
  %1638 = vrot.lane.b32.xlu0 %v1636, 32
  %v1639 = vpop.permute.xlu0 %1638
  %v1641 = vadd.f32 %v1631, %v1639
  %v1642 = vtanh.pop %v1641
  %1644 = vrot.lane.b32.xlu0 %v1642, 64
  %v1645 = vpop.permute.xlu0 %1644
  %v1647 = vmul.f32 %v1629, %v1645
  %1649 = vrot.lane.b32.xlu0 %v1647, 32
  %v1650 = vpop.permute.xlu0 %1649
  %v1651 = vsel %vm183, %v1650, 0
  %1653 = vmatprep.subr.mxu0 0.0
  %1654 = vmatpush1.msra.mxu0 %v1149
  %1655 = vmatprep.subr.mxu0 0.0
  %1656 = vmatpush1.msra.mxu0 %v1150
  %1657 = vmatprep.subr.mxu0 0.0
  %1658 = vmatpush1.msra.mxu0 %v1151
  %1659 = vmatprep.subr.mxu0 0.0
  %1660 = vmatpush1.msra.mxu0 %v1152
  %1661 = vmatprep.subr.mxu0 0.0
  %1662 = vmatpush1.msra.mxu0 0.0
  %1663 = vmatprep.subr.mxu0 0.0
  %1664 = vmatpush1.msra.mxu0 0.0
  %1665 = vmatprep.subr.mxu0 0.0
  %1666 = vmatpush1.msra.mxu0 0.0
  %1667 = vmatprep.subr.mxu0 0.0
  %1668 = vmatpush1.msra.mxu0 0.0
  %1669 = vmatprep.subr.mxu0 0.0
  %1670 = vmatpush1.msra.mxu0 0.0
  %1671 = vmatprep.subr.mxu0 0.0
  %1672 = vmatpush1.msra.mxu0 0.0
  %1673 = vmatprep.subr.mxu0 0.0
  %1674 = vmatpush1.msra.mxu0 0.0
  %1675 = vmatprep.subr.mxu0 0.0
  %1676 = vmatpush1.msra.mxu0 0.0
  %1677 = vmatprep.subr.mxu0 0.0
  %1678 = vmatpush1.msra.mxu0 0.0
  %1679 = vmatprep.subr.mxu0 0.0
  %1680 = vmatpush1.msra.mxu0 0.0
  %1681 = vmatprep.subr.mxu0 0.0
  %1682 = vmatpush1.msra.mxu0 0.0
  %1683 = vmatprep.subr.mxu0 0.0
  %1684 = vmatpush1.msra.mxu0 0.0
  %1685 = vmatprep.subr.mxu0 0.0
  %1686 = vmatpush1.msra.mxu0 0.0
  %1687 = vmatprep.subr.mxu0 0.0
  %1688 = vmatpush1.msra.mxu0 0.0
  %1689 = vmatprep.subr.mxu0 0.0
  %1690 = vmatpush1.msra.mxu0 0.0
  %1691 = vmatprep.subr.mxu0 0.0
  %1692 = vmatpush1.msra.mxu0 0.0
  %1693 = vmatprep.subr.mxu0 0.0
  %1694 = vmatpush1.msra.mxu0 0.0
  %1695 = vmatprep.subr.mxu0 0.0
  %1696 = vmatpush1.msra.mxu0 0.0
  %1697 = vmatprep.subr.mxu0 0.0
  %1698 = vmatpush1.msra.mxu0 0.0
  %1699 = vmatprep.subr.mxu0 0.0
  %1700 = vmatpush1.msra.mxu0 0.0
  %1701 = vmatprep.subr.mxu0 0.0
  %1702 = vmatpush1.msra.mxu0 0.0
  %1703 = vmatprep.subr.mxu0 0.0
  %1704 = vmatpush1.msra.mxu0 0.0
  %1705 = vmatprep.subr.mxu0 0.0
  %1706 = vmatpush1.msra.mxu0 0.0
  %1707 = vmatprep.subr.mxu0 0.0
  %1708 = vmatpush1.msra.mxu0 0.0
  %1709 = vmatprep.subr.mxu0 0.0
  %1710 = vmatpush1.msra.mxu0 0.0
  %1711 = vmatprep.subr.mxu0 0.0
  %1712 = vmatpush1.msra.mxu0 0.0
  %1713 = vmatprep.subr.mxu0 0.0
  %1714 = vmatpush1.msra.mxu0 0.0
  %1715 = vmatprep.subr.mxu0 0.0
  %1716 = vmatpush1.msra.mxu0 0.0
  %1717 = vmatprep.mubr.f32.mxu0 0.0
  %1718 = vmatmul.mubr.f32.gmra.mrb[0].mxu0 %v1651
  %v1719 = vpop.f32.mrb[0].mxu0
  %v1720 = vadd.f32 0.0, %v1719
  %v1721 = vpop.f32.mrb[0].mxu0
  %1722 = vdwg.mxu0
  %v1723 = vadd.f32 %v1136, %v1720
  %v1724 = vxor.u32 %v1723, 2147483648
  %v1725 = vmul.f32 %v1724, 1.442695
  %v1726 = vpow.pop %v1725
  %v1727 = vadd.f32 %v1726, 1.0
  %v1728 = vrcp.pop %v1727
  %v1729 = vmul.f32 1.0, %v1728
  %v1730 = vtanh.pop %v1723
  %v1731 = vmul.f32 %v1729, %v1641
  %1733 = vrot.lane.b32.xlu0 %v1730, 64
  %v1734 = vpop.permute.xlu0 %1733
  %v1736 = vmul.f32 %v1729, %v1734
  %1738 = vrot.lane.b32.xlu0 %v1736, 32
  %v1739 = vpop.permute.xlu0 %1738
  %v1741 = vadd.f32 %v1731, %v1739
  %v1742 = vtanh.pop %v1741
  %1744 = vrot.lane.b32.xlu0 %v1742, 64
  %v1745 = vpop.permute.xlu0 %1744
  %v1747 = vmul.f32 %v1729, %v1745
  %1749 = vrot.lane.b32.xlu0 %v1747, 32
  %v1750 = vpop.permute.xlu0 %1749
  %v1751 = vsel %vm183, %v1750, 0
  %1753 = vmatprep.subr.mxu0 0.0
  %1754 = vmatpush1.msra.mxu0 %v1149
  %1755 = vmatprep.subr.mxu0 0.0
  %1756 = vmatpush1.msra.mxu0 %v1150
  %1757 = vmatprep.subr.mxu0 0.0
  %1758 = vmatpush1.msra.mxu0 %v1151
  %1759 = vmatprep.subr.mxu0 0.0
  %1760 = vmatpush1.msra.mxu0 %v1152
  %1761 = vmatprep.subr.mxu0 0.0
  %1762 = vmatpush1.msra.mxu0 0.0
  %1763 = vmatprep.subr.mxu0 0.0
  %1764 = vmatpush1.msra.mxu0 0.0
  %1765 = vmatprep.subr.mxu0 0.0
  %1766 = vmatpush1.msra.mxu0 0.0
  %1767 = vmatprep.subr.mxu0 0.0
  %1768 = vmatpush1.msra.mxu0 0.0
  %1769 = vmatprep.subr.mxu0 0.0
  %1770 = vmatpush1.msra.mxu0 0.0
  %1771 = vmatprep.subr.mxu0 0.0
  %1772 = vmatpush1.msra.mxu0 0.0
  %1773 = vmatprep.subr.mxu0 0.0
  %1774 = vmatpush1.msra.mxu0 0.0
  %1775 = vmatprep.subr.mxu0 0.0
  %1776 = vmatpush1.msra.mxu0 0.0
  %1777 = vmatprep.subr.mxu0 0.0
  %1778 = vmatpush1.msra.mxu0 0.0
  %1779 = vmatprep.subr.mxu0 0.0
  %1780 = vmatpush1.msra.mxu0 0.0
  %1781 = vmatprep.subr.mxu0 0.0
  %1782 = vmatpush1.msra.mxu0 0.0
  %1783 = vmatprep.subr.mxu0 0.0
  %1784 = vmatpush1.msra.mxu0 0.0
  %1785 = vmatprep.subr.mxu0 0.0
  %1786 = vmatpush1.msra.mxu0 0.0
  %1787 = vmatprep.subr.mxu0 0.0
  %1788 = vmatpush1.msra.mxu0 0.0
  %1789 = vmatprep.subr.mxu0 0.0
  %1790 = vmatpush1.msra.mxu0 0.0
  %1791 = vmatprep.subr.mxu0 0.0
  %1792 = vmatpush1.msra.mxu0 0.0
  %1793 = vmatprep.subr.mxu0 0.0
  %1794 = vmatpush1.msra.mxu0 0.0
  %1795 = vmatprep.subr.mxu0 0.0
  %1796 = vmatpush1.msra.mxu0 0.0
  %1797 = vmatprep.subr.mxu0 0.0
  %1798 = vmatpush1.msra.mxu0 0.0
  %1799 = vmatprep.subr.mxu0 0.0
  %1800 = vmatpush1.msra.mxu0 0.0
  %1801 = vmatprep.subr.mxu0 0.0
  %1802 = vmatpush1.msra.mxu0 0.0
  %1803 = vmatprep.subr.mxu0 0.0
  %1804 = vmatpush1.msra.mxu0 0.0
  %1805 = vmatprep.subr.mxu0 0.0
  %1806 = vmatpush1.msra.mxu0 0.0
  %1807 = vmatprep.subr.mxu0 0.0
  %1808 = vmatpush1.msra.mxu0 0.0
  %1809 = vmatprep.subr.mxu0 0.0
  %1810 = vmatpush1.msra.mxu0 0.0
  %1811 = vmatprep.subr.mxu0 0.0
  %1812 = vmatpush1.msra.mxu0 0.0
  %1813 = vmatprep.subr.mxu0 0.0
  %1814 = vmatpush1.msra.mxu0 0.0
  %1815 = vmatprep.subr.mxu0 0.0
  %1816 = vmatpush1.msra.mxu0 0.0
  %1817 = vmatprep.mubr.f32.mxu0 0.0
  %1818 = vmatmul.mubr.f32.gmra.mrb[0].mxu0 %v1751
  %v1819 = vpop.f32.mrb[0].mxu0
  %v1820 = vadd.f32 0.0, %v1819
  %v1821 = vpop.f32.mrb[0].mxu0
  %1822 = vdwg.mxu0
  %v1823 = vadd.f32 %v1141, %v1820
  %v1824 = vxor.u32 %v1823, 2147483648
  %v1825 = vmul.f32 %v1824, 1.442695
  %v1826 = vpow.pop %v1825
  %v1827 = vadd.f32 %v1826, 1.0
  %v1828 = vrcp.pop %v1827
  %v1829 = vmul.f32 1.0, %v1828
  %v1830 = vtanh.pop %v1823
  %v1831 = vmul.f32 %v1829, %v1741
  %1833 = vrot.lane.b32.xlu0 %v1830, 64
  %v1834 = vpop.permute.xlu0 %1833
  %v1836 = vmul.f32 %v1829, %v1834
  %1838 = vrot.lane.b32.xlu0 %v1836, 32
  %v1839 = vpop.permute.xlu0 %1838
  %v1841 = vadd.f32 %v1831, %v1839
  %v1842 = vtanh.pop %v1841
  %1844 = vrot.lane.b32.xlu0 %v1842, 64
  %v1845 = vpop.permute.xlu0 %1844
  %v1847 = vmul.f32 %v1829, %v1845
  %1849 = vrot.lane.b32.xlu0 %v1847, 32
  %v1850 = vpop.permute.xlu0 %1849
  %v1851 = vsel %vm183, %v1850, 0
  %1853 = vmatprep.subr.mxu0 0.0
  %1854 = vmatpush1.msra.mxu0 %v1149
  %1855 = vmatprep.subr.mxu0 0.0
  %1856 = vmatpush1.msra.mxu0 %v1150
  %1857 = vmatprep.subr.mxu0 0.0
  %1858 = vmatpush1.msra.mxu0 %v1151
  %1859 = vmatprep.subr.mxu0 0.0
  %1860 = vmatpush1.msra.mxu0 %v1152
  %1861 = vmatprep.subr.mxu0 0.0
  %1862 = vmatpush1.msra.mxu0 0.0
  %1863 = vmatprep.subr.mxu0 0.0
  %1864 = vmatpush1.msra.mxu0 0.0
  %1865 = vmatprep.subr.mxu0 0.0
  %1866 = vmatpush1.msra.mxu0 0.0
  %1867 = vmatprep.subr.mxu0 0.0
  %1868 = vmatpush1.msra.mxu0 0.0
  %1869 = vmatprep.subr.mxu0 0.0
  %1870 = vmatpush1.msra.mxu0 0.0
  %1871 = vmatprep.subr.mxu0 0.0
  %1872 = vmatpush1.msra.mxu0 0.0
  %1873 = vmatprep.subr.mxu0 0.0
  %1874 = vmatpush1.msra.mxu0 0.0
  %1875 = vmatprep.subr.mxu0 0.0
  %1876 = vmatpush1.msra.mxu0 0.0
  %1877 = vmatprep.subr.mxu0 0.0
  %1878 = vmatpush1.msra.mxu0 0.0
  %1879 = vmatprep.subr.mxu0 0.0
  %1880 = vmatpush1.msra.mxu0 0.0
  %1881 = vmatprep.subr.mxu0 0.0
  %1882 = vmatpush1.msra.mxu0 0.0
  %1883 = vmatprep.subr.mxu0 0.0
  %1884 = vmatpush1.msra.mxu0 0.0
  %1885 = vmatprep.subr.mxu0 0.0
  %1886 = vmatpush1.msra.mxu0 0.0
  %1887 = vmatprep.subr.mxu0 0.0
  %1888 = vmatpush1.msra.mxu0 0.0
  %1889 = vmatprep.subr.mxu0 0.0
  %1890 = vmatpush1.msra.mxu0 0.0
  %1891 = vmatprep.subr.mxu0 0.0
  %1892 = vmatpush1.msra.mxu0 0.0
  %1893 = vmatprep.subr.mxu0 0.0
  %1894 = vmatpush1.msra.mxu0 0.0
  %1895 = vmatprep.subr.mxu0 0.0
  %1896 = vmatpush1.msra.mxu0 0.0
  %1897 = vmatprep.subr.mxu0 0.0
  %1898 = vmatpush1.msra.mxu0 0.0
  %1899 = vmatprep.subr.mxu0 0.0
  %1900 = vmatpush1.msra.mxu0 0.0
  %1901 = vmatprep.subr.mxu0 0.0
  %1902 = vmatpush1.msra.mxu0 0.0
  %1903 = vmatprep.subr.mxu0 0.0
  %1904 = vmatpush1.msra.mxu0 0.0
  %1905 = vmatprep.subr.mxu0 0.0
  %1906 = vmatpush1.msra.mxu0 0.0
  %1907 = vmatprep.subr.mxu0 0.0
  %1908 = vmatpush1.msra.mxu0 0.0
  %1909 = vmatprep.subr.mxu0 0.0
  %1910 = vmatpush1.msra.mxu0 0.0
  %1911 = vmatprep.subr.mxu0 0.0
  %1912 = vmatpush1.msra.mxu0 0.0
  %1913 = vmatprep.subr.mxu0 0.0
  %1914 = vmatpush1.msra.mxu0 0.0
  %1915 = vmatprep.subr.mxu0 0.0
  %1916 = vmatpush1.msra.mxu0 0.0
  %1917 = vmatprep.mubr.f32.mxu0 0.0
  %1918 = vmatmul.mubr.f32.gmra.mrb[0].mxu0 %v1851
  %v1919 = vpop.f32.mrb[0].mxu0
  %v1920 = vadd.f32 0.0, %v1919
  %v1921 = vpop.f32.mrb[0].mxu0
  %1922 = vdwg.mxu0
  %v1923 = vadd.f32 %v1146, %v1920
  %v1924 = vxor.u32 %v1923, 2147483648
  %v1925 = vmul.f32 %v1924, 1.442695
  %v1926 = vpow.pop %v1925
  %v1927 = vadd.f32 %v1926, 1.0
  %v1928 = vrcp.pop %v1927
  %v1929 = vmul.f32 1.0, %v1928
  %v1930 = vtanh.pop %v1923
  %v1931 = vmul.f32 %v1929, %v1841
  %1933 = vrot.lane.b32.xlu0 %v1930, 64
  %v1934 = vpop.permute.xlu0 %1933
  %v1936 = vmul.f32 %v1929, %v1934
  %1938 = vrot.lane.b32.xlu0 %v1936, 32
  %v1939 = vpop.permute.xlu0 %1938
  %v1941 = vadd.f32 %v1931, %v1939
  %v1942 = vtanh.pop %v1941
  %1944 = vrot.lane.b32.xlu0 %v1942, 64
  %v1945 = vpop.permute.xlu0 %1944
  %v1947 = vmul.f32 %v1929, %v1945
  %v1948 = vld [vmem:[%s7] sm:$0xff]
  %v1949 = vld [vmem:[%s7 + $0x8] sm:$0xff]
  %v1950 = vld [vmem:[%s7 + $0x10] sm:$0xff]
  %v1951 = vld [vmem:[%s7 + $0x18] sm:$0xff]
  %v1952 = vld [vmem:[%s8] sm:$0x1]
  %v1954 = vlaneseq
  %v1955 = vshrl.u32 %v1954, 7
  %v1956 = vsub.s32 0, %v1955
  %v1957 = vrot.slane %v1952, %v1956
  %1960 = vrot.lane.b32.xlu0 %v1947, 32
  %v1961 = vpop.permute.xlu0 %1960
  %v1962 = vsel %vm183, %v1961, 0
  %1964 = vmatprep.subr.mxu0 0.0
  %1965 = vmatpush1.msra.mxu0 %v1948
  %1966 = vmatprep.subr.mxu0 0.0
  %1967 = vmatpush1.msra.mxu0 %v1949
  %1968 = vmatprep.subr.mxu0 0.0
  %1969 = vmatpush1.msra.mxu0 %v1950
  %1970 = vmatprep.subr.mxu0 0.0
  %1971 = vmatpush1.msra.mxu0 %v1951
  %1972 = vmatprep.subr.mxu0 0.0
  %1973 = vmatpush1.msra.mxu0 0.0
  %1974 = vmatprep.subr.mxu0 0.0
  %1975 = vmatpush1.msra.mxu0 0.0
  %1976 = vmatprep.subr.mxu0 0.0
  %1977 = vmatpush1.msra.mxu0 0.0
  %1978 = vmatprep.subr.mxu0 0.0
  %1979 = vmatpush1.msra.mxu0 0.0
  %1980 = vmatprep.subr.mxu0 0.0
  %1981 = vmatpush1.msra.mxu0 0.0
  %1982 = vmatprep.subr.mxu0 0.0
  %1983 = vmatpush1.msra.mxu0 0.0
  %1984 = vmatprep.subr.mxu0 0.0
  %1985 = vmatpush1.msra.mxu0 0.0
  %1986 = vmatprep.subr.mxu0 0.0
  %1987 = vmatpush1.msra.mxu0 0.0
  %1988 = vmatprep.subr.mxu0 0.0
  %1989 = vmatpush1.msra.mxu0 0.0
  %1990 = vmatprep.subr.mxu0 0.0
  %1991 = vmatpush1.msra.mxu0 0.0
  %1992 = vmatprep.subr.mxu0 0.0
  %1993 = vmatpush1.msra.mxu0 0.0
  %1994 = vmatprep.subr.mxu0 0.0
  %1995 = vmatpush1.msra.mxu0 0.0
  %1996 = vmatprep.subr.mxu0 0.0
  %1997 = vmatpush1.msra.mxu0 0.0
  %1998 = vmatprep.subr.mxu0 0.0
  %1999 = vmatpush1.msra.mxu0 0.0
  %2000 = vmatprep.subr.mxu0 0.0
  %2001 = vmatpush1.msra.mxu0 0.0
  %2002 = vmatprep.subr.mxu0 0.0
  %2003 = vmatpush1.msra.mxu0 0.0
  %2004 = vmatprep.subr.mxu0 0.0
  %2005 = vmatpush1.msra.mxu0 0.0
  %2006 = vmatprep.subr.mxu0 0.0
  %2007 = vmatpush1.msra.mxu0 0.0
  %2008 = vmatprep.subr.mxu0 0.0
  %2009 = vmatpush1.msra.mxu0 0.0
  %2010 = vmatprep.subr.mxu0 0.0
  %2011 = vmatpush1.msra.mxu0 0.0
  %2012 = vmatprep.subr.mxu0 0.0
  %2013 = vmatpush1.msra.mxu0 0.0
  %2014 = vmatprep.subr.mxu0 0.0
  %2015 = vmatpush1.msra.mxu0 0.0
  %2016 = vmatprep.subr.mxu0 0.0
  %2017 = vmatpush1.msra.mxu0 0.0
  %2018 = vmatprep.subr.mxu0 0.0
  %2019 = vmatpush1.msra.mxu0 0.0
  %2020 = vmatprep.subr.mxu0 0.0
  %2021 = vmatpush1.msra.mxu0 0.0
  %2022 = vmatprep.subr.mxu0 0.0
  %2023 = vmatpush1.msra.mxu0 0.0
  %2024 = vmatprep.subr.mxu0 0.0
  %2025 = vmatpush1.msra.mxu0 0.0
  %2026 = vmatprep.subr.mxu0 0.0
  %2027 = vmatpush1.msra.mxu0 0.0
  %2028 = vmatprep.mubr.f32.mxu0 0.0
  %2029 = vmatmul.mubr.f32.gmra.mrb[0].mxu0 %v1962
  %v2030 = vpop.f32.mrb[0].mxu0
  %v2031 = vadd.f32 %v1957, %v2030
  %v2032 = vpop.f32.mrb[0].mxu0
  %2033 = vdwg.mxu0
  %2034 = vst [vmem:[%s9] sm:$0xff] %v2031
  // Predicated region
  $region38: #{_lambda_.1} parent=0 // pred_check
    _
  $region39: #{_lambda_.1} parent=0 // pred_check_branch
    %2036 = sbr.rel (0) target = $region41
  $region40: #{_lambda_.1} parent=0 // pred_region
    _
  $region41: #{_lambda_.1} parent=0 // pred_fallthru
    _
  // Predicated region
  $region42: #{_lambda_.1} parent=0 // pred_check
    _
  $region43: #{_lambda_.1} parent=0 // pred_check_branch
    %2038 = sbr.rel (0) target = $region45
  $region44: #{_lambda_.1} parent=0 // pred_region
    _
  $region45: #{_lambda_.1} parent=0 // pred_fallthru
    _

</llo_original>
